<compile_context>
chip_gen: v5e
topology: v5e:2x2
jax: 0.10.0
libtpu: 0.0.40
codegen_flags: <defaults>
</compile_context>

<pallas_src>
import math

import jax
import jax.numpy as jnp
from jax.experimental import pallas as pl
from jax.experimental.pallas import tpu as pltpu


def make_kernel(B, S, SP, H, n_heads, n_layers, P, out_lanes,
                approx_recip=True):
    hd = H // n_heads
    eps = 1e-5
    BSP = B * SP
    bf16 = jnp.bfloat16
    f32 = jnp.float32

    # column offsets inside the fused per-layer vector slab (f32, width 13H+P+1)
    OFF_BQKV = 0
    OFF_BO = 3 * H
    OFF_LN1G = 4 * H
    OFF_LN1B = 5 * H
    OFF_B1 = 6 * H
    OFF_B2 = 10 * H
    OFF_LN2G = 11 * H
    OFF_LN2B = 12 * H
    OFF_BP1 = 13 * H
    OFF_BP2 = 13 * H + P

    def layer_norm(x, g, b):
        mu = jnp.mean(x, axis=-1, keepdims=True)
        xc = x - mu                                    # computed once
        var = jnp.mean(xc * xc, axis=-1, keepdims=True)
        return xc * jax.lax.rsqrt(var + eps) * g + b

    def softmax_rows(sc):
        sc = sc - jnp.max(sc, axis=-1, keepdims=True)
        p = jnp.exp(sc)
        d = jnp.sum(p, axis=-1, keepdims=True)
        if approx_recip:
            return p * pl.reciprocal(d, approx=True)
        return p / d

    def kernel(src_ref, addmask_ref, wproj_ref, wA_ref, w2_ref, vecs_ref,
               wp1_ref, wp2_ref, out_ref):
        # additive input term (CLS emb / proj bias / turn emb) and the
        # batch-block-diagonal key mask share one f32 slab.
        add = addmask_ref[:, 0:H]                       # (BSP, H)
        mask = addmask_ref[:, H:H + BSP]                # (BSP, BSP), 0 / -1e30

        # ---- input projection (one batched matmul) -------------------------
        x = jnp.dot(src_ref[...], wproj_ref[...],
                    preferred_element_type=f32) + add   # (BSP, H) f32

        # ---- transformer encoder layers (post-norm, ReLU FFN) --------------
        # n_layers is tiny -> static unrolling; weights stay VMEM-resident
        # (~50 KB).  For deep/wide models, move layers to an "arbitrary" grid
        # axis with streamed weight BlockSpecs instead.
        for l in range(n_layers):
            xb = x.astype(bf16)
            # fused QKV projection (scale folded into the Q columns/bias).
            qkv = jnp.dot(xb, wA_ref[l, :, 0:3 * H],
                          preferred_element_type=f32) \
                + vecs_ref[l, :, OFF_BQKV:OFF_BQKV + 3 * H]   # (BSP, 3H)

            # per-head attention over the full row slab; the additive mask
            # keeps items independent and hides padding key rows, so the
            # batch loop disappears and each head is two plain 2-D matmuls.
            head_outs = []
            for h in range(n_heads):
                c = h * hd
                qh = qkv[:, c:c + hd].astype(bf16)                  # (BSP, hd)
                kh = qkv[:, H + c:H + c + hd].astype(bf16)
                vh = qkv[:, 2 * H + c:2 * H + c + hd].astype(bf16)
                sc = jax.lax.dot_general(
                    qh, kh, (((1,), (1,)), ((), ())),
                    preferred_element_type=f32) + mask              # (BSP, BSP)
                p = softmax_rows(sc)
                head_outs.append(
                    jnp.dot(p.astype(bf16), vh,
                            preferred_element_type=f32).astype(bf16))
            # single lane-axis concat of register values (no scratch writes).
            attn_in = jnp.concatenate(head_outs, axis=-1)           # (BSP, H) bf16

            attn = jnp.dot(attn_in, wA_ref[l, :, 3 * H:4 * H],
                           preferred_element_type=f32) \
                 + vecs_ref[l, :, OFF_BO:OFF_BO + H]
            x = layer_norm(x + attn,
                           vecs_ref[l, :, OFF_LN1G:OFF_LN1G + H],
                           vecs_ref[l, :, OFF_LN1B:OFF_LN1B + H])

            h1 = jnp.maximum(
                jnp.dot(x.astype(bf16), wA_ref[l, :, 4 * H:8 * H],
                        preferred_element_type=f32)
                + vecs_ref[l, :, OFF_B1:OFF_B1 + 4 * H], 0.0)
            ffn = jnp.dot(h1.astype(bf16), w2_ref[l],
                          preferred_element_type=f32) \
                + vecs_ref[l, :, OFF_B2:OFF_B2 + H]
            x = layer_norm(x + ffn,
                           vecs_ref[l, :, OFF_LN2G:OFF_LN2G + H],
                           vecs_ref[l, :, OFF_LN2B:OFF_LN2B + H])

        # ---- pooler MLP (Linear -> Tanh -> Linear) --------------------------
        # Runs on all rows (same padded MXU tile as CLS-only at this size);
        # the wrapper keeps the CLS rows.  Lane-broadcast so the output store
        # is a single full-lane, unmasked store.
        p1 = jnp.tanh(jnp.dot(x.astype(bf16), wp1_ref[...],
                              preferred_element_type=f32)
                      + vecs_ref[0, :, OFF_BP1:OFF_BP1 + P])
        val = jnp.dot(p1.astype(bf16), wp2_ref[...],
                      preferred_element_type=f32) \
            + vecs_ref[0, :, OFF_BP2:OFF_BP2 + 1]
        out_ref[...] = jnp.broadcast_to(val, (BSP, out_lanes))

    return kernel


def init_params(key, D, H, n_heads, n_layers, P):
    ks = jax.random.split(key, 32)
    it = iter(ks)

    def normal(shape, s=0.05):
        return (s * jax.random.normal(next(it), shape)).astype(jnp.float32)

    return dict(
        wproj=normal((D, H)), bproj=normal((H,)),
        cls=normal((1, H)),                        # nn.Embedding(1, H)
        turn_table=normal((22, H)),                # nn.Embedding(22, H)
        wq=normal((n_layers, H, H)), bq=normal((n_layers, H)),
        wk=normal((n_layers, H, H)), bk=normal((n_layers, H)),
        wv=normal((n_layers, H, H)), bv=normal((n_layers, H)),
        wo=normal((n_layers, H, H)), bo=normal((n_layers, H)),
        ln1g=jnp.ones((n_layers, H), jnp.float32),
        ln1b=jnp.zeros((n_layers, H), jnp.float32),
        w1=normal((n_layers, H, 4 * H)), b1=normal((n_layers, 4 * H)),
        w2=normal((n_layers, 4 * H, H)), b2=normal((n_layers, H)),
        ln2g=jnp.ones((n_layers, H), jnp.float32),
        ln2b=jnp.zeros((n_layers, H), jnp.float32),
        wp1=normal((H, P)), bp1=normal((P,)),      # MLP: Linear -> Tanh -> Linear
        wp2=normal((P, 1)), bp2=normal((1,)),
    )


def critic_transformer_forward(params, last_usr, last_sys, belief, db, turns,
                               n_heads, n_layers, approx_recip=True):
    B, D = db.shape
    H = params["wproj"].shape[1]
    P = params["wp1"].shape[1]
    S_in = 4
    S = S_in + 1                      # CLS token prepended
    SP = ((S + 7) // 8) * 8           # pad each item's rows to a sublane tile
    BSP = B * SP
    hd = H // n_heads
    OUT_LANES = 128
    f32, bf16 = jnp.float32, jnp.bfloat16

    # ---- glue: zero-padded (B*SP, D) token slab (row 0 = CLS, rows 1..4 = the
    # four context embeddings, rows 5..SP-1 = padding).
    src = jnp.stack([last_usr, last_sys, belief, db], axis=1)          # (B,4,D)
    src_full = jnp.concatenate(
        [jnp.zeros((B, 1, D), f32), src, jnp.zeros((B, SP - S, D), f32)],
        axis=1).reshape(BSP, D)

    # ---- glue: additive term (CLS embedding / src_proj bias / turn embedding)
    # fused with the batch-block-diagonal key mask (free lanes, one DMA).
    turn_emb = params["turn_table"][turns]                             # (B,H)
    tok_add = jnp.broadcast_to(
        (params["bproj"][None, :] + turn_emb)[:, None, :], (B, S_in, H))
    cls_add = jnp.broadcast_to(params["cls"][None, :, :], (B, 1, H))
    add_terms = jnp.concatenate(
        [cls_add, tok_add, jnp.zeros((B, SP - S, H), f32)],
        axis=1).reshape(BSP, H)
    rows = jnp.arange(BSP)
    same_item = (rows[:, None] // SP) == (rows[None, :] // SP)
    valid_key = (rows[None, :] % SP) < S
    mask = jnp.where(same_item & valid_key, 0.0, -1e30).astype(f32)    # (BSP,BSP)
    add_mask = jnp.concatenate([add_terms, mask], axis=1)              # (BSP,H+BSP)

    # ---- glue: fuse weights / biases (scale folded into Q), bf16 matmul
    # weights, one f32 vector slab for all per-layer biases / LN params and
    # the pooler biases.
    scale = 1.0 / math.sqrt(hd)
    wqkv = jnp.concatenate(
        [params["wq"] * scale, params["wk"], params["wv"]], axis=-1)   # (L,H,3H)
    bqkv = jnp.concatenate(
        [params["bq"] * scale, params["bk"], params["bv"]], axis=-1)   # (L,3H)
    wA = jnp.concatenate([wqkv, params["wo"], params["w1"]], axis=-1)  # (L,H,8H)
    pool_b = jnp.concatenate([params["bp1"], params["bp2"]])           # (P+1,)
    vecs = jnp.concatenate(
        [bqkv, params["bo"], params["ln1g"], params["ln1b"],
         params["b1"], params["b2"], params["ln2g"], params["ln2b"],
         jnp.broadcast_to(pool_b[None, :], (n_layers, P + 1))],
        axis=-1)[:, None, :].astype(f32)                               # (L,1,13H+P+1)

    args = (
        src_full.astype(bf16),           # 1: tokens
        add_mask,                        # 2: additive term | attention mask (f32)
        params["wproj"].astype(bf16),    # 3: input projection
        wA.astype(bf16),                 # 4: per-layer [QKV | WO | W1]
        params["w2"].astype(bf16),       # 5: per-layer FFN down
        vecs,                            # 6: all biases / LN / pooler biases
        params["wp1"].astype(bf16),      # 7: pooler hidden
        params["wp2"].astype(bf16),      # 8: pooler out
    )

    kernel = make_kernel(B, S, SP, H, n_heads, n_layers, P, OUT_LANES,
                         approx_recip=approx_recip)
    vmem = pltpu.MemorySpace.VMEM
    # Single ungridded invocation: at B=2 / H=32 the kernel is latency-bound
    # and a grid would only add per-step pipeline overhead.  For large B, tile
    # the batch onto a grid axis with dimension_semantics=("parallel",).
    out = pl.pallas_call(
        kernel,
        out_shape=jax.ShapeDtypeStruct((BSP, OUT_LANES), f32),
        in_specs=[pl.BlockSpec(memory_space=vmem) for _ in args],
        out_specs=pl.BlockSpec(memory_space=vmem),
    )(*args)
    # CLS rows sit at row b*SP; only lane 0 of the lane-broadcast block matters.
    return out[::SP, 0:1]


if __name__ == "__main__":
    B = 2                     # batch
    D = 16                    # context_hidden_size
    H = 32                    # hidden_size
    n_heads = 4
    n_layers = 2
    pool_hidden = 16          # pool_hidden_sizes = (16,)

    key = jax.random.PRNGKey(0)
    kp, k1, k2, k3, k4, kt = jax.random.split(key, 6)
    params = init_params(kp, D, H, n_heads, n_layers, pool_hidden)

    last_usr = jax.random.normal(k1, (B, D), jnp.float32)
    last_sys = jax.random.normal(k2, (B, D), jnp.float32)
    belief = jax.random.normal(k3, (B, D), jnp.float32)
    db = jax.random.normal(k4, (B, D), jnp.float32)
    turns = jax.random.randint(kt, (B,), 0, 22)

    v = critic_transformer_forward(params, last_usr, last_sys, belief, db,
                                   turns, n_heads, n_layers)
    jax.block_until_ready(v)
    assert v.shape == (B, 1) and v.dtype == jnp.float32
    print("KERNEL_OK")
</pallas_src>

<mosaic_0001>
module attributes {stable_mosaic.version = 11 : i64} {
  func.func @kernel(%arg0: memref<16x16xbf16, #tpu.memory_space<vmem>>, %arg1: memref<16x48xf32, #tpu.memory_space<vmem>>, %arg2: memref<16x32xbf16, #tpu.memory_space<vmem>>, %arg3: memref<2x32x256xbf16, #tpu.memory_space<vmem>>, %arg4: memref<2x128x32xbf16, #tpu.memory_space<vmem>>, %arg5: memref<2x1x433xf32, #tpu.memory_space<vmem>>, %arg6: memref<32x16xbf16, #tpu.memory_space<vmem>>, %arg7: memref<16x1xbf16, #tpu.memory_space<vmem>>, %arg8: memref<16x128xf32, #tpu.memory_space<vmem>>) attributes {dimension_semantics = [], scalar_prefetch = 0 : i64, scratch_operands = 0 : i64, tpu.core_type = #tpu.core_type<tc>} {
    %c0 = arith.constant 0 : index
    %c0_0 = arith.constant 0 : index
    %0 = vector.load %arg1[%c0, %c0_0] : memref<16x48xf32, #tpu.memory_space<vmem>>, vector<16x32xf32>
    %c0_1 = arith.constant 0 : index
    %c32 = arith.constant 32 : index
    %1 = vector.load %arg1[%c0_1, %c32] : memref<16x48xf32, #tpu.memory_space<vmem>>, vector<16x16xf32>
    %c0_2 = arith.constant 0 : index
    %c0_3 = arith.constant 0 : index
    %2 = vector.load %arg0[%c0_2, %c0_3] : memref<16x16xbf16, #tpu.memory_space<vmem>>, vector<16x16xbf16>
    %c0_4 = arith.constant 0 : index
    %c0_5 = arith.constant 0 : index
    %3 = vector.load %arg2[%c0_4, %c0_5] : memref<16x32xbf16, #tpu.memory_space<vmem>>, vector<16x32xbf16>
    %cst = arith.constant dense<0.000000e+00> : vector<16x32xf32>
    %4 = tpu.matmul %2, %3, %cst {dimension_numbers = #tpu.dot_dimension_numbers<[1], [0], [0], [1], [0, 0, 1, 1], [], []>} : vector<16x16xbf16>, vector<16x32xbf16>, vector<16x32xf32> -> vector<16x32xf32>
    %5 = arith.addf %4, %0 : vector<16x32xf32>
    %6 = arith.truncf %5 : vector<16x32xf32> to vector<16x32xbf16>
    %c0_6 = arith.constant 0 : index
    %c0_7 = arith.constant 0 : index
    %c0_8 = arith.constant 0 : index
    %7 = vector.load %arg3[%c0_6, %c0_7, %c0_8] : memref<2x32x256xbf16, #tpu.memory_space<vmem>>, vector<1x32x96xbf16>
    %8 = vector.shape_cast %7 : vector<1x32x96xbf16> to vector<32x96xbf16>
    %cst_9 = arith.constant dense<0.000000e+00> : vector<16x96xf32>
    %9 = tpu.matmul %6, %8, %cst_9 {dimension_numbers = #tpu.dot_dimension_numbers<[1], [0], [0], [1], [0, 0, 1, 1], [], []>} : vector<16x32xbf16>, vector<32x96xbf16>, vector<16x96xf32> -> vector<16x96xf32>
    %c0_10 = arith.constant 0 : index
    %c0_11 = arith.constant 0 : index
    %c0_12 = arith.constant 0 : index
    %10 = vector.load %arg5[%c0_10, %c0_11, %c0_12] : memref<2x1x433xf32, #tpu.memory_space<vmem>>, vector<1x1x96xf32>
    %11 = vector.shape_cast %10 : vector<1x1x96xf32> to vector<1x96xf32>
    %12 = vector.broadcast %11 : vector<1x96xf32> to vector<16x96xf32>
    %13 = arith.addf %9, %12 : vector<16x96xf32>
    %14 = vector.extract_strided_slice %13 {offsets = [0, 0], sizes = [16, 8], strides = [1, 1]} : vector<16x96xf32> to vector<16x8xf32>
    %15 = arith.truncf %14 : vector<16x8xf32> to vector<16x8xbf16>
    %16 = vector.extract_strided_slice %13 {offsets = [0, 32], sizes = [16, 8], strides = [1, 1]} : vector<16x96xf32> to vector<16x8xf32>
    %17 = arith.truncf %16 : vector<16x8xf32> to vector<16x8xbf16>
    %18 = vector.extract_strided_slice %13 {offsets = [0, 64], sizes = [16, 8], strides = [1, 1]} : vector<16x96xf32> to vector<16x8xf32>
    %19 = arith.truncf %18 : vector<16x8xf32> to vector<16x8xbf16>
    %cst_13 = arith.constant dense<0.000000e+00> : vector<16x16xf32>
    %20 = tpu.matmul %15, %17, %cst_13 {dimension_numbers = #tpu.dot_dimension_numbers<[1], [1], [0], [0], [0, 0, 1, 0], [], []>} : vector<16x8xbf16>, vector<16x8xbf16>, vector<16x16xf32> -> vector<16x16xf32>
    %21 = arith.addf %20, %1 : vector<16x16xf32>
    %cst_14 = arith.constant dense<0xFF800000> : vector<16xf32>
    %22 = vector.multi_reduction <maximumf>, %21, %cst_14 [1] : vector<16x16xf32> to vector<16xf32>
    %23 = vector.shape_cast %22 : vector<16xf32> to vector<16x1xf32>
    %24 = vector.broadcast %23 : vector<16x1xf32> to vector<16x16xf32>
    %25 = arith.subf %21, %24 : vector<16x16xf32>
    %26 = math.exp %25 : vector<16x16xf32>
    %cst_15 = arith.constant dense<0.000000e+00> : vector<16xf32>
    %27 = vector.multi_reduction <add>, %26, %cst_15 [1] : vector<16x16xf32> to vector<16xf32>
    %28 = vector.shape_cast %27 : vector<16xf32> to vector<16x1xf32>
    %29 = tpu.reciprocal %28 {approx = true} : vector<16x1xf32> -> vector<16x1xf32>
    %30 = vector.broadcast %29 : vector<16x1xf32> to vector<16x16xf32>
    %31 = arith.mulf %26, %30 : vector<16x16xf32>
    %32 = arith.truncf %31 : vector<16x16xf32> to vector<16x16xbf16>
    %cst_16 = arith.constant dense<0.000000e+00> : vector<16x8xf32>
    %33 = tpu.matmul %32, %19, %cst_16 {dimension_numbers = #tpu.dot_dimension_numbers<[1], [0], [0], [1], [0, 0, 1, 1], [], []>} : vector<16x16xbf16>, vector<16x8xbf16>, vector<16x8xf32> -> vector<16x8xf32>
    %34 = arith.truncf %33 : vector<16x8xf32> to vector<16x8xbf16>
    %35 = vector.extract_strided_slice %13 {offsets = [0, 8], sizes = [16, 8], strides = [1, 1]} : vector<16x96xf32> to vector<16x8xf32>
    %36 = arith.truncf %35 : vector<16x8xf32> to vector<16x8xbf16>
    %37 = vector.extract_strided_slice %13 {offsets = [0, 40], sizes = [16, 8], strides = [1, 1]} : vector<16x96xf32> to vector<16x8xf32>
    %38 = arith.truncf %37 : vector<16x8xf32> to vector<16x8xbf16>
    %39 = vector.extract_strided_slice %13 {offsets = [0, 72], sizes = [16, 8], strides = [1, 1]} : vector<16x96xf32> to vector<16x8xf32>
    %40 = arith.truncf %39 : vector<16x8xf32> to vector<16x8xbf16>
    %cst_17 = arith.constant dense<0.000000e+00> : vector<16x16xf32>
    %41 = tpu.matmul %36, %38, %cst_17 {dimension_numbers = #tpu.dot_dimension_numbers<[1], [1], [0], [0], [0, 0, 1, 0], [], []>} : vector<16x8xbf16>, vector<16x8xbf16>, vector<16x16xf32> -> vector<16x16xf32>
    %42 = arith.addf %41, %1 : vector<16x16xf32>
    %cst_18 = arith.constant dense<0xFF800000> : vector<16xf32>
    %43 = vector.multi_reduction <maximumf>, %42, %cst_18 [1] : vector<16x16xf32> to vector<16xf32>
    %44 = vector.shape_cast %43 : vector<16xf32> to vector<16x1xf32>
    %45 = vector.broadcast %44 : vector<16x1xf32> to vector<16x16xf32>
    %46 = arith.subf %42, %45 : vector<16x16xf32>
    %47 = math.exp %46 : vector<16x16xf32>
    %cst_19 = arith.constant dense<0.000000e+00> : vector<16xf32>
    %48 = vector.multi_reduction <add>, %47, %cst_19 [1] : vector<16x16xf32> to vector<16xf32>
    %49 = vector.shape_cast %48 : vector<16xf32> to vector<16x1xf32>
    %50 = tpu.reciprocal %49 {approx = true} : vector<16x1xf32> -> vector<16x1xf32>
    %51 = vector.broadcast %50 : vector<16x1xf32> to vector<16x16xf32>
    %52 = arith.mulf %47, %51 : vector<16x16xf32>
    %53 = arith.truncf %52 : vector<16x16xf32> to vector<16x16xbf16>
    %cst_20 = arith.constant dense<0.000000e+00> : vector<16x8xf32>
    %54 = tpu.matmul %53, %40, %cst_20 {dimension_numbers = #tpu.dot_dimension_numbers<[1], [0], [0], [1], [0, 0, 1, 1], [], []>} : vector<16x16xbf16>, vector<16x8xbf16>, vector<16x8xf32> -> vector<16x8xf32>
    %55 = arith.truncf %54 : vector<16x8xf32> to vector<16x8xbf16>
    %56 = vector.extract_strided_slice %13 {offsets = [0, 16], sizes = [16, 8], strides = [1, 1]} : vector<16x96xf32> to vector<16x8xf32>
    %57 = arith.truncf %56 : vector<16x8xf32> to vector<16x8xbf16>
    %58 = vector.extract_strided_slice %13 {offsets = [0, 48], sizes = [16, 8], strides = [1, 1]} : vector<16x96xf32> to vector<16x8xf32>
    %59 = arith.truncf %58 : vector<16x8xf32> to vector<16x8xbf16>
    %60 = vector.extract_strided_slice %13 {offsets = [0, 80], sizes = [16, 8], strides = [1, 1]} : vector<16x96xf32> to vector<16x8xf32>
    %61 = arith.truncf %60 : vector<16x8xf32> to vector<16x8xbf16>
    %cst_21 = arith.constant dense<0.000000e+00> : vector<16x16xf32>
    %62 = tpu.matmul %57, %59, %cst_21 {dimension_numbers = #tpu.dot_dimension_numbers<[1], [1], [0], [0], [0, 0, 1, 0], [], []>} : vector<16x8xbf16>, vector<16x8xbf16>, vector<16x16xf32> -> vector<16x16xf32>
    %63 = arith.addf %62, %1 : vector<16x16xf32>
    %cst_22 = arith.constant dense<0xFF800000> : vector<16xf32>
    %64 = vector.multi_reduction <maximumf>, %63, %cst_22 [1] : vector<16x16xf32> to vector<16xf32>
    %65 = vector.shape_cast %64 : vector<16xf32> to vector<16x1xf32>
    %66 = vector.broadcast %65 : vector<16x1xf32> to vector<16x16xf32>
    %67 = arith.subf %63, %66 : vector<16x16xf32>
    %68 = math.exp %67 : vector<16x16xf32>
    %cst_23 = arith.constant dense<0.000000e+00> : vector<16xf32>
    %69 = vector.multi_reduction <add>, %68, %cst_23 [1] : vector<16x16xf32> to vector<16xf32>
    %70 = vector.shape_cast %69 : vector<16xf32> to vector<16x1xf32>
    %71 = tpu.reciprocal %70 {approx = true} : vector<16x1xf32> -> vector<16x1xf32>
    %72 = vector.broadcast %71 : vector<16x1xf32> to vector<16x16xf32>
    %73 = arith.mulf %68, %72 : vector<16x16xf32>
    %74 = arith.truncf %73 : vector<16x16xf32> to vector<16x16xbf16>
    %cst_24 = arith.constant dense<0.000000e+00> : vector<16x8xf32>
    %75 = tpu.matmul %74, %61, %cst_24 {dimension_numbers = #tpu.dot_dimension_numbers<[1], [0], [0], [1], [0, 0, 1, 1], [], []>} : vector<16x16xbf16>, vector<16x8xbf16>, vector<16x8xf32> -> vector<16x8xf32>
    %76 = arith.truncf %75 : vector<16x8xf32> to vector<16x8xbf16>
    %77 = vector.extract_strided_slice %13 {offsets = [0, 24], sizes = [16, 8], strides = [1, 1]} : vector<16x96xf32> to vector<16x8xf32>
    %78 = arith.truncf %77 : vector<16x8xf32> to vector<16x8xbf16>
    %79 = vector.extract_strided_slice %13 {offsets = [0, 56], sizes = [16, 8], strides = [1, 1]} : vector<16x96xf32> to vector<16x8xf32>
    %80 = arith.truncf %79 : vector<16x8xf32> to vector<16x8xbf16>
    %81 = vector.extract_strided_slice %13 {offsets = [0, 88], sizes = [16, 8], strides = [1, 1]} : vector<16x96xf32> to vector<16x8xf32>
    %82 = arith.truncf %81 : vector<16x8xf32> to vector<16x8xbf16>
    %cst_25 = arith.constant dense<0.000000e+00> : vector<16x16xf32>
    %83 = tpu.matmul %78, %80, %cst_25 {dimension_numbers = #tpu.dot_dimension_numbers<[1], [1], [0], [0], [0, 0, 1, 0], [], []>} : vector<16x8xbf16>, vector<16x8xbf16>, vector<16x16xf32> -> vector<16x16xf32>
    %84 = arith.addf %83, %1 : vector<16x16xf32>
    %cst_26 = arith.constant dense<0xFF800000> : vector<16xf32>
    %85 = vector.multi_reduction <maximumf>, %84, %cst_26 [1] : vector<16x16xf32> to vector<16xf32>
    %86 = vector.shape_cast %85 : vector<16xf32> to vector<16x1xf32>
    %87 = vector.broadcast %86 : vector<16x1xf32> to vector<16x16xf32>
    %88 = arith.subf %84, %87 : vector<16x16xf32>
    %89 = math.exp %88 : vector<16x16xf32>
    %cst_27 = arith.constant dense<0.000000e+00> : vector<16xf32>
    %90 = vector.multi_reduction <add>, %89, %cst_27 [1] : vector<16x16xf32> to vector<16xf32>
    %91 = vector.shape_cast %90 : vector<16xf32> to vector<16x1xf32>
    %92 = tpu.reciprocal %91 {approx = true} : vector<16x1xf32> -> vector<16x1xf32>
    %93 = vector.broadcast %92 : vector<16x1xf32> to vector<16x16xf32>
    %94 = arith.mulf %89, %93 : vector<16x16xf32>
    %95 = arith.truncf %94 : vector<16x16xf32> to vector<16x16xbf16>
    %cst_28 = arith.constant dense<0.000000e+00> : vector<16x8xf32>
    %96 = tpu.matmul %95, %82, %cst_28 {dimension_numbers = #tpu.dot_dimension_numbers<[1], [0], [0], [1], [0, 0, 1, 1], [], []>} : vector<16x16xbf16>, vector<16x8xbf16>, vector<16x8xf32> -> vector<16x8xf32>
    %97 = arith.truncf %96 : vector<16x8xf32> to vector<16x8xbf16>
    %98 = tpu.concatenate %34, %55, %76, %97 in 1 : vector<16x8xbf16>, vector<16x8xbf16>, vector<16x8xbf16>, vector<16x8xbf16> -> vector<16x32xbf16>
    %c0_29 = arith.constant 0 : index
    %c0_30 = arith.constant 0 : index
    %c96 = arith.constant 96 : index
    %99 = vector.load %arg3[%c0_29, %c0_30, %c96] : memref<2x32x256xbf16, #tpu.memory_space<vmem>>, vector<1x32x32xbf16>
    %100 = vector.shape_cast %99 : vector<1x32x32xbf16> to vector<32x32xbf16>
    %cst_31 = arith.constant dense<0.000000e+00> : vector<16x32xf32>
    %101 = tpu.matmul %98, %100, %cst_31 {dimension_numbers = #tpu.dot_dimension_numbers<[1], [0], [0], [1], [0, 0, 1, 1], [], []>} : vector<16x32xbf16>, vector<32x32xbf16>, vector<16x32xf32> -> vector<16x32xf32>
    %c0_32 = arith.constant 0 : index
    %c0_33 = arith.constant 0 : index
    %c96_34 = arith.constant 96 : index
    %102 = vector.load %arg5[%c0_32, %c0_33, %c96_34] : memref<2x1x433xf32, #tpu.memory_space<vmem>>, vector<1x1x32xf32>
    %103 = vector.shape_cast %102 : vector<1x1x32xf32> to vector<1x32xf32>
    %104 = vector.broadcast %103 : vector<1x32xf32> to vector<16x32xf32>
    %105 = arith.addf %101, %104 : vector<16x32xf32>
    %106 = arith.addf %5, %105 : vector<16x32xf32>
    %c0_35 = arith.constant 0 : index
    %c0_36 = arith.constant 0 : index
    %c128 = arith.constant 128 : index
    %107 = vector.load %arg5[%c0_35, %c0_36, %c128] : memref<2x1x433xf32, #tpu.memory_space<vmem>>, vector<1x1x32xf32>
    %108 = vector.shape_cast %107 : vector<1x1x32xf32> to vector<1x32xf32>
    %c0_37 = arith.constant 0 : index
    %c0_38 = arith.constant 0 : index
    %c160 = arith.constant 160 : index
    %109 = vector.load %arg5[%c0_37, %c0_38, %c160] : memref<2x1x433xf32, #tpu.memory_space<vmem>>, vector<1x1x32xf32>
    %110 = vector.shape_cast %109 : vector<1x1x32xf32> to vector<1x32xf32>
    %cst_39 = arith.constant dense<0.000000e+00> : vector<16xf32>
    %111 = vector.multi_reduction <add>, %106, %cst_39 [1] : vector<16x32xf32> to vector<16xf32>
    %112 = vector.shape_cast %111 : vector<16xf32> to vector<16x1xf32>
    %cst_40 = arith.constant 3.200000e+01 : f32
    %113 = vector.broadcast %cst_40 : f32 to vector<16x1xf32>
    %114 = arith.divf %112, %113 : vector<16x1xf32>
    %115 = vector.broadcast %114 : vector<16x1xf32> to vector<16x32xf32>
    %116 = arith.subf %106, %115 : vector<16x32xf32>
    %117 = arith.mulf %116, %116 : vector<16x32xf32>
    %cst_41 = arith.constant dense<0.000000e+00> : vector<16xf32>
    %118 = vector.multi_reduction <add>, %117, %cst_41 [1] : vector<16x32xf32> to vector<16xf32>
    %119 = vector.shape_cast %118 : vector<16xf32> to vector<16x1xf32>
    %cst_42 = arith.constant 3.200000e+01 : f32
    %120 = vector.broadcast %cst_42 : f32 to vector<16x1xf32>
    %121 = arith.divf %119, %120 : vector<16x1xf32>
    %cst_43 = arith.constant 9.99999974E-6 : f32
    %122 = vector.broadcast %cst_43 : f32 to vector<16x1xf32>
    %123 = arith.addf %121, %122 : vector<16x1xf32>
    %124 = math.rsqrt %123 : vector<16x1xf32>
    %125 = vector.broadcast %124 : vector<16x1xf32> to vector<16x32xf32>
    %126 = arith.mulf %116, %125 : vector<16x32xf32>
    %127 = vector.broadcast %108 : vector<1x32xf32> to vector<16x32xf32>
    %128 = arith.mulf %126, %127 : vector<16x32xf32>
    %129 = vector.broadcast %110 : vector<1x32xf32> to vector<16x32xf32>
    %130 = arith.addf %128, %129 : vector<16x32xf32>
    %131 = arith.truncf %130 : vector<16x32xf32> to vector<16x32xbf16>
    %c0_44 = arith.constant 0 : index
    %c0_45 = arith.constant 0 : index
    %c128_46 = arith.constant 128 : index
    %132 = vector.load %arg3[%c0_44, %c0_45, %c128_46] : memref<2x32x256xbf16, #tpu.memory_space<vmem>>, vector<1x32x128xbf16>
    %133 = vector.shape_cast %132 : vector<1x32x128xbf16> to vector<32x128xbf16>
    %cst_47 = arith.constant dense<0.000000e+00> : vector<16x128xf32>
    %134 = tpu.matmul %131, %133, %cst_47 {dimension_numbers = #tpu.dot_dimension_numbers<[1], [0], [0], [1], [0, 0, 1, 1], [], []>} : vector<16x32xbf16>, vector<32x128xbf16>, vector<16x128xf32> -> vector<16x128xf32>
    %c0_48 = arith.constant 0 : index
    %c0_49 = arith.constant 0 : index
    %c192 = arith.constant 192 : index
    %135 = vector.load %arg5[%c0_48, %c0_49, %c192] : memref<2x1x433xf32, #tpu.memory_space<vmem>>, vector<1x1x128xf32>
    %136 = vector.shape_cast %135 : vector<1x1x128xf32> to vector<1x128xf32>
    %137 = vector.broadcast %136 : vector<1x128xf32> to vector<16x128xf32>
    %138 = arith.addf %134, %137 : vector<16x128xf32>
    %cst_50 = arith.constant 0.000000e+00 : f32
    %139 = vector.broadcast %cst_50 : f32 to vector<16x128xf32>
    %140 = arith.maximumf %138, %139 : vector<16x128xf32>
    %141 = arith.truncf %140 : vector<16x128xf32> to vector<16x128xbf16>
    %c0_51 = arith.constant 0 : index
    %c0_52 = arith.constant 0 : index
    %c0_53 = arith.constant 0 : index
    %142 = vector.load %arg4[%c0_51, %c0_52, %c0_53] : memref<2x128x32xbf16, #tpu.memory_space<vmem>>, vector<1x128x32xbf16>
    %143 = vector.shape_cast %142 : vector<1x128x32xbf16> to vector<128x32xbf16>
    %cst_54 = arith.constant dense<0.000000e+00> : vector<16x32xf32>
    %144 = tpu.matmul %141, %143, %cst_54 {dimension_numbers = #tpu.dot_dimension_numbers<[1], [0], [0], [1], [0, 0, 1, 1], [], []>} : vector<16x128xbf16>, vector<128x32xbf16>, vector<16x32xf32> -> vector<16x32xf32>
    %c0_55 = arith.constant 0 : index
    %c0_56 = arith.constant 0 : index
    %c320 = arith.constant 320 : index
    %145 = vector.load %arg5[%c0_55, %c0_56, %c320] : memref<2x1x433xf32, #tpu.memory_space<vmem>>, vector<1x1x32xf32>
    %146 = vector.shape_cast %145 : vector<1x1x32xf32> to vector<1x32xf32>
    %147 = vector.broadcast %146 : vector<1x32xf32> to vector<16x32xf32>
    %148 = arith.addf %144, %147 : vector<16x32xf32>
    %149 = arith.addf %130, %148 : vector<16x32xf32>
    %c0_57 = arith.constant 0 : index
    %c0_58 = arith.constant 0 : index
    %c352 = arith.constant 352 : index
    %150 = vector.load %arg5[%c0_57, %c0_58, %c352] : memref<2x1x433xf32, #tpu.memory_space<vmem>>, vector<1x1x32xf32>
    %151 = vector.shape_cast %150 : vector<1x1x32xf32> to vector<1x32xf32>
    %c0_59 = arith.constant 0 : index
    %c0_60 = arith.constant 0 : index
    %c384 = arith.constant 384 : index
    %152 = vector.load %arg5[%c0_59, %c0_60, %c384] : memref<2x1x433xf32, #tpu.memory_space<vmem>>, vector<1x1x32xf32>
    %153 = vector.shape_cast %152 : vector<1x1x32xf32> to vector<1x32xf32>
    %cst_61 = arith.constant dense<0.000000e+00> : vector<16xf32>
    %154 = vector.multi_reduction <add>, %149, %cst_61 [1] : vector<16x32xf32> to vector<16xf32>
    %155 = vector.shape_cast %154 : vector<16xf32> to vector<16x1xf32>
    %cst_62 = arith.constant 3.200000e+01 : f32
    %156 = vector.broadcast %cst_62 : f32 to vector<16x1xf32>
    %157 = arith.divf %155, %156 : vector<16x1xf32>
    %158 = vector.broadcast %157 : vector<16x1xf32> to vector<16x32xf32>
    %159 = arith.subf %149, %158 : vector<16x32xf32>
    %160 = arith.mulf %159, %159 : vector<16x32xf32>
    %cst_63 = arith.constant dense<0.000000e+00> : vector<16xf32>
    %161 = vector.multi_reduction <add>, %160, %cst_63 [1] : vector<16x32xf32> to vector<16xf32>
    %162 = vector.shape_cast %161 : vector<16xf32> to vector<16x1xf32>
    %cst_64 = arith.constant 3.200000e+01 : f32
    %163 = vector.broadcast %cst_64 : f32 to vector<16x1xf32>
    %164 = arith.divf %162, %163 : vector<16x1xf32>
    %cst_65 = arith.constant 9.99999974E-6 : f32
    %165 = vector.broadcast %cst_65 : f32 to vector<16x1xf32>
    %166 = arith.addf %164, %165 : vector<16x1xf32>
    %167 = math.rsqrt %166 : vector<16x1xf32>
    %168 = vector.broadcast %167 : vector<16x1xf32> to vector<16x32xf32>
    %169 = arith.mulf %159, %168 : vector<16x32xf32>
    %170 = vector.broadcast %151 : vector<1x32xf32> to vector<16x32xf32>
    %171 = arith.mulf %169, %170 : vector<16x32xf32>
    %172 = vector.broadcast %153 : vector<1x32xf32> to vector<16x32xf32>
    %173 = arith.addf %171, %172 : vector<16x32xf32>
    %174 = arith.truncf %173 : vector<16x32xf32> to vector<16x32xbf16>
    %c1 = arith.constant 1 : index
    %c0_66 = arith.constant 0 : index
    %c0_67 = arith.constant 0 : index
    %175 = vector.load %arg3[%c1, %c0_66, %c0_67] : memref<2x32x256xbf16, #tpu.memory_space<vmem>>, vector<1x32x96xbf16>
    %176 = vector.shape_cast %175 : vector<1x32x96xbf16> to vector<32x96xbf16>
    %cst_68 = arith.constant dense<0.000000e+00> : vector<16x96xf32>
    %177 = tpu.matmul %174, %176, %cst_68 {dimension_numbers = #tpu.dot_dimension_numbers<[1], [0], [0], [1], [0, 0, 1, 1], [], []>} : vector<16x32xbf16>, vector<32x96xbf16>, vector<16x96xf32> -> vector<16x96xf32>
    %c1_69 = arith.constant 1 : index
    %c0_70 = arith.constant 0 : index
    %c0_71 = arith.constant 0 : index
    %178 = vector.load %arg5[%c1_69, %c0_70, %c0_71] : memref<2x1x433xf32, #tpu.memory_space<vmem>>, vector<1x1x96xf32>
    %179 = vector.shape_cast %178 : vector<1x1x96xf32> to vector<1x96xf32>
    %180 = vector.broadcast %179 : vector<1x96xf32> to vector<16x96xf32>
    %181 = arith.addf %177, %180 : vector<16x96xf32>
    %182 = vector.extract_strided_slice %181 {offsets = [0, 0], sizes = [16, 8], strides = [1, 1]} : vector<16x96xf32> to vector<16x8xf32>
    %183 = arith.truncf %182 : vector<16x8xf32> to vector<16x8xbf16>
    %184 = vector.extract_strided_slice %181 {offsets = [0, 32], sizes = [16, 8], strides = [1, 1]} : vector<16x96xf32> to vector<16x8xf32>
    %185 = arith.truncf %184 : vector<16x8xf32> to vector<16x8xbf16>
    %186 = vector.extract_strided_slice %181 {offsets = [0, 64], sizes = [16, 8], strides = [1, 1]} : vector<16x96xf32> to vector<16x8xf32>
    %187 = arith.truncf %186 : vector<16x8xf32> to vector<16x8xbf16>
    %cst_72 = arith.constant dense<0.000000e+00> : vector<16x16xf32>
    %188 = tpu.matmul %183, %185, %cst_72 {dimension_numbers = #tpu.dot_dimension_numbers<[1], [1], [0], [0], [0, 0, 1, 0], [], []>} : vector<16x8xbf16>, vector<16x8xbf16>, vector<16x16xf32> -> vector<16x16xf32>
    %189 = arith.addf %188, %1 : vector<16x16xf32>
    %cst_73 = arith.constant dense<0xFF800000> : vector<16xf32>
    %190 = vector.multi_reduction <maximumf>, %189, %cst_73 [1] : vector<16x16xf32> to vector<16xf32>
    %191 = vector.shape_cast %190 : vector<16xf32> to vector<16x1xf32>
    %192 = vector.broadcast %191 : vector<16x1xf32> to vector<16x16xf32>
    %193 = arith.subf %189, %192 : vector<16x16xf32>
    %194 = math.exp %193 : vector<16x16xf32>
    %cst_74 = arith.constant dense<0.000000e+00> : vector<16xf32>
    %195 = vector.multi_reduction <add>, %194, %cst_74 [1] : vector<16x16xf32> to vector<16xf32>
    %196 = vector.shape_cast %195 : vector<16xf32> to vector<16x1xf32>
    %197 = tpu.reciprocal %196 {approx = true} : vector<16x1xf32> -> vector<16x1xf32>
    %198 = vector.broadcast %197 : vector<16x1xf32> to vector<16x16xf32>
    %199 = arith.mulf %194, %198 : vector<16x16xf32>
    %200 = arith.truncf %199 : vector<16x16xf32> to vector<16x16xbf16>
    %cst_75 = arith.constant dense<0.000000e+00> : vector<16x8xf32>
    %201 = tpu.matmul %200, %187, %cst_75 {dimension_numbers = #tpu.dot_dimension_numbers<[1], [0], [0], [1], [0, 0, 1, 1], [], []>} : vector<16x16xbf16>, vector<16x8xbf16>, vector<16x8xf32> -> vector<16x8xf32>
    %202 = arith.truncf %201 : vector<16x8xf32> to vector<16x8xbf16>
    %203 = vector.extract_strided_slice %181 {offsets = [0, 8], sizes = [16, 8], strides = [1, 1]} : vector<16x96xf32> to vector<16x8xf32>
    %204 = arith.truncf %203 : vector<16x8xf32> to vector<16x8xbf16>
    %205 = vector.extract_strided_slice %181 {offsets = [0, 40], sizes = [16, 8], strides = [1, 1]} : vector<16x96xf32> to vector<16x8xf32>
    %206 = arith.truncf %205 : vector<16x8xf32> to vector<16x8xbf16>
    %207 = vector.extract_strided_slice %181 {offsets = [0, 72], sizes = [16, 8], strides = [1, 1]} : vector<16x96xf32> to vector<16x8xf32>
    %208 = arith.truncf %207 : vector<16x8xf32> to vector<16x8xbf16>
    %cst_76 = arith.constant dense<0.000000e+00> : vector<16x16xf32>
    %209 = tpu.matmul %204, %206, %cst_76 {dimension_numbers = #tpu.dot_dimension_numbers<[1], [1], [0], [0], [0, 0, 1, 0], [], []>} : vector<16x8xbf16>, vector<16x8xbf16>, vector<16x16xf32> -> vector<16x16xf32>
    %210 = arith.addf %209, %1 : vector<16x16xf32>
    %cst_77 = arith.constant dense<0xFF800000> : vector<16xf32>
    %211 = vector.multi_reduction <maximumf>, %210, %cst_77 [1] : vector<16x16xf32> to vector<16xf32>
    %212 = vector.shape_cast %211 : vector<16xf32> to vector<16x1xf32>
    %213 = vector.broadcast %212 : vector<16x1xf32> to vector<16x16xf32>
    %214 = arith.subf %210, %213 : vector<16x16xf32>
    %215 = math.exp %214 : vector<16x16xf32>
    %cst_78 = arith.constant dense<0.000000e+00> : vector<16xf32>
    %216 = vector.multi_reduction <add>, %215, %cst_78 [1] : vector<16x16xf32> to vector<16xf32>
    %217 = vector.shape_cast %216 : vector<16xf32> to vector<16x1xf32>
    %218 = tpu.reciprocal %217 {approx = true} : vector<16x1xf32> -> vector<16x1xf32>
    %219 = vector.broadcast %218 : vector<16x1xf32> to vector<16x16xf32>
    %220 = arith.mulf %215, %219 : vector<16x16xf32>
    %221 = arith.truncf %220 : vector<16x16xf32> to vector<16x16xbf16>
    %cst_79 = arith.constant dense<0.000000e+00> : vector<16x8xf32>
    %222 = tpu.matmul %221, %208, %cst_79 {dimension_numbers = #tpu.dot_dimension_numbers<[1], [0], [0], [1], [0, 0, 1, 1], [], []>} : vector<16x16xbf16>, vector<16x8xbf16>, vector<16x8xf32> -> vector<16x8xf32>
    %223 = arith.truncf %222 : vector<16x8xf32> to vector<16x8xbf16>
    %224 = vector.extract_strided_slice %181 {offsets = [0, 16], sizes = [16, 8], strides = [1, 1]} : vector<16x96xf32> to vector<16x8xf32>
    %225 = arith.truncf %224 : vector<16x8xf32> to vector<16x8xbf16>
    %226 = vector.extract_strided_slice %181 {offsets = [0, 48], sizes = [16, 8], strides = [1, 1]} : vector<16x96xf32> to vector<16x8xf32>
    %227 = arith.truncf %226 : vector<16x8xf32> to vector<16x8xbf16>
    %228 = vector.extract_strided_slice %181 {offsets = [0, 80], sizes = [16, 8], strides = [1, 1]} : vector<16x96xf32> to vector<16x8xf32>
    %229 = arith.truncf %228 : vector<16x8xf32> to vector<16x8xbf16>
    %cst_80 = arith.constant dense<0.000000e+00> : vector<16x16xf32>
    %230 = tpu.matmul %225, %227, %cst_80 {dimension_numbers = #tpu.dot_dimension_numbers<[1], [1], [0], [0], [0, 0, 1, 0], [], []>} : vector<16x8xbf16>, vector<16x8xbf16>, vector<16x16xf32> -> vector<16x16xf32>
    %231 = arith.addf %230, %1 : vector<16x16xf32>
    %cst_81 = arith.constant dense<0xFF800000> : vector<16xf32>
    %232 = vector.multi_reduction <maximumf>, %231, %cst_81 [1] : vector<16x16xf32> to vector<16xf32>
    %233 = vector.shape_cast %232 : vector<16xf32> to vector<16x1xf32>
    %234 = vector.broadcast %233 : vector<16x1xf32> to vector<16x16xf32>
    %235 = arith.subf %231, %234 : vector<16x16xf32>
    %236 = math.exp %235 : vector<16x16xf32>
    %cst_82 = arith.constant dense<0.000000e+00> : vector<16xf32>
    %237 = vector.multi_reduction <add>, %236, %cst_82 [1] : vector<16x16xf32> to vector<16xf32>
    %238 = vector.shape_cast %237 : vector<16xf32> to vector<16x1xf32>
    %239 = tpu.reciprocal %238 {approx = true} : vector<16x1xf32> -> vector<16x1xf32>
    %240 = vector.broadcast %239 : vector<16x1xf32> to vector<16x16xf32>
    %241 = arith.mulf %236, %240 : vector<16x16xf32>
    %242 = arith.truncf %241 : vector<16x16xf32> to vector<16x16xbf16>
    %cst_83 = arith.constant dense<0.000000e+00> : vector<16x8xf32>
    %243 = tpu.matmul %242, %229, %cst_83 {dimension_numbers = #tpu.dot_dimension_numbers<[1], [0], [0], [1], [0, 0, 1, 1], [], []>} : vector<16x16xbf16>, vector<16x8xbf16>, vector<16x8xf32> -> vector<16x8xf32>
    %244 = arith.truncf %243 : vector<16x8xf32> to vector<16x8xbf16>
    %245 = vector.extract_strided_slice %181 {offsets = [0, 24], sizes = [16, 8], strides = [1, 1]} : vector<16x96xf32> to vector<16x8xf32>
    %246 = arith.truncf %245 : vector<16x8xf32> to vector<16x8xbf16>
    %247 = vector.extract_strided_slice %181 {offsets = [0, 56], sizes = [16, 8], strides = [1, 1]} : vector<16x96xf32> to vector<16x8xf32>
    %248 = arith.truncf %247 : vector<16x8xf32> to vector<16x8xbf16>
    %249 = vector.extract_strided_slice %181 {offsets = [0, 88], sizes = [16, 8], strides = [1, 1]} : vector<16x96xf32> to vector<16x8xf32>
    %250 = arith.truncf %249 : vector<16x8xf32> to vector<16x8xbf16>
    %cst_84 = arith.constant dense<0.000000e+00> : vector<16x16xf32>
    %251 = tpu.matmul %246, %248, %cst_84 {dimension_numbers = #tpu.dot_dimension_numbers<[1], [1], [0], [0], [0, 0, 1, 0], [], []>} : vector<16x8xbf16>, vector<16x8xbf16>, vector<16x16xf32> -> vector<16x16xf32>
    %252 = arith.addf %251, %1 : vector<16x16xf32>
    %cst_85 = arith.constant dense<0xFF800000> : vector<16xf32>
    %253 = vector.multi_reduction <maximumf>, %252, %cst_85 [1] : vector<16x16xf32> to vector<16xf32>
    %254 = vector.shape_cast %253 : vector<16xf32> to vector<16x1xf32>
    %255 = vector.broadcast %254 : vector<16x1xf32> to vector<16x16xf32>
    %256 = arith.subf %252, %255 : vector<16x16xf32>
    %257 = math.exp %256 : vector<16x16xf32>
    %cst_86 = arith.constant dense<0.000000e+00> : vector<16xf32>
    %258 = vector.multi_reduction <add>, %257, %cst_86 [1] : vector<16x16xf32> to vector<16xf32>
    %259 = vector.shape_cast %258 : vector<16xf32> to vector<16x1xf32>
    %260 = tpu.reciprocal %259 {approx = true} : vector<16x1xf32> -> vector<16x1xf32>
    %261 = vector.broadcast %260 : vector<16x1xf32> to vector<16x16xf32>
    %262 = arith.mulf %257, %261 : vector<16x16xf32>
    %263 = arith.truncf %262 : vector<16x16xf32> to vector<16x16xbf16>
    %cst_87 = arith.constant dense<0.000000e+00> : vector<16x8xf32>
    %264 = tpu.matmul %263, %250, %cst_87 {dimension_numbers = #tpu.dot_dimension_numbers<[1], [0], [0], [1], [0, 0, 1, 1], [], []>} : vector<16x16xbf16>, vector<16x8xbf16>, vector<16x8xf32> -> vector<16x8xf32>
    %265 = arith.truncf %264 : vector<16x8xf32> to vector<16x8xbf16>
    %266 = tpu.concatenate %202, %223, %244, %265 in 1 : vector<16x8xbf16>, vector<16x8xbf16>, vector<16x8xbf16>, vector<16x8xbf16> -> vector<16x32xbf16>
    %c1_88 = arith.constant 1 : index
    %c0_89 = arith.constant 0 : index
    %c96_90 = arith.constant 96 : index
    %267 = vector.load %arg3[%c1_88, %c0_89, %c96_90] : memref<2x32x256xbf16, #tpu.memory_space<vmem>>, vector<1x32x32xbf16>
    %268 = vector.shape_cast %267 : vector<1x32x32xbf16> to vector<32x32xbf16>
    %cst_91 = arith.constant dense<0.000000e+00> : vector<16x32xf32>
    %269 = tpu.matmul %266, %268, %cst_91 {dimension_numbers = #tpu.dot_dimension_numbers<[1], [0], [0], [1], [0, 0, 1, 1], [], []>} : vector<16x32xbf16>, vector<32x32xbf16>, vector<16x32xf32> -> vector<16x32xf32>
    %c1_92 = arith.constant 1 : index
    %c0_93 = arith.constant 0 : index
    %c96_94 = arith.constant 96 : index
    %270 = vector.load %arg5[%c1_92, %c0_93, %c96_94] : memref<2x1x433xf32, #tpu.memory_space<vmem>>, vector<1x1x32xf32>
    %271 = vector.shape_cast %270 : vector<1x1x32xf32> to vector<1x32xf32>
    %272 = vector.broadcast %271 : vector<1x32xf32> to vector<16x32xf32>
    %273 = arith.addf %269, %272 : vector<16x32xf32>
    %274 = arith.addf %173, %273 : vector<16x32xf32>
    %c1_95 = arith.constant 1 : index
    %c0_96 = arith.constant 0 : index
    %c128_97 = arith.constant 128 : index
    %275 = vector.load %arg5[%c1_95, %c0_96, %c128_97] : memref<2x1x433xf32, #tpu.memory_space<vmem>>, vector<1x1x32xf32>
    %276 = vector.shape_cast %275 : vector<1x1x32xf32> to vector<1x32xf32>
    %c1_98 = arith.constant 1 : index
    %c0_99 = arith.constant 0 : index
    %c160_100 = arith.constant 160 : index
    %277 = vector.load %arg5[%c1_98, %c0_99, %c160_100] : memref<2x1x433xf32, #tpu.memory_space<vmem>>, vector<1x1x32xf32>
    %278 = vector.shape_cast %277 : vector<1x1x32xf32> to vector<1x32xf32>
    %cst_101 = arith.constant dense<0.000000e+00> : vector<16xf32>
    %279 = vector.multi_reduction <add>, %274, %cst_101 [1] : vector<16x32xf32> to vector<16xf32>
    %280 = vector.shape_cast %279 : vector<16xf32> to vector<16x1xf32>
    %cst_102 = arith.constant 3.200000e+01 : f32
    %281 = vector.broadcast %cst_102 : f32 to vector<16x1xf32>
    %282 = arith.divf %280, %281 : vector<16x1xf32>
    %283 = vector.broadcast %282 : vector<16x1xf32> to vector<16x32xf32>
    %284 = arith.subf %274, %283 : vector<16x32xf32>
    %285 = arith.mulf %284, %284 : vector<16x32xf32>
    %cst_103 = arith.constant dense<0.000000e+00> : vector<16xf32>
    %286 = vector.multi_reduction <add>, %285, %cst_103 [1] : vector<16x32xf32> to vector<16xf32>
    %287 = vector.shape_cast %286 : vector<16xf32> to vector<16x1xf32>
    %cst_104 = arith.constant 3.200000e+01 : f32
    %288 = vector.broadcast %cst_104 : f32 to vector<16x1xf32>
    %289 = arith.divf %287, %288 : vector<16x1xf32>
    %cst_105 = arith.constant 9.99999974E-6 : f32
    %290 = vector.broadcast %cst_105 : f32 to vector<16x1xf32>
    %291 = arith.addf %289, %290 : vector<16x1xf32>
    %292 = math.rsqrt %291 : vector<16x1xf32>
    %293 = vector.broadcast %292 : vector<16x1xf32> to vector<16x32xf32>
    %294 = arith.mulf %284, %293 : vector<16x32xf32>
    %295 = vector.broadcast %276 : vector<1x32xf32> to vector<16x32xf32>
    %296 = arith.mulf %294, %295 : vector<16x32xf32>
    %297 = vector.broadcast %278 : vector<1x32xf32> to vector<16x32xf32>
    %298 = arith.addf %296, %297 : vector<16x32xf32>
    %299 = arith.truncf %298 : vector<16x32xf32> to vector<16x32xbf16>
    %c1_106 = arith.constant 1 : index
    %c0_107 = arith.constant 0 : index
    %c128_108 = arith.constant 128 : index
    %300 = vector.load %arg3[%c1_106, %c0_107, %c128_108] : memref<2x32x256xbf16, #tpu.memory_space<vmem>>, vector<1x32x128xbf16>
    %301 = vector.shape_cast %300 : vector<1x32x128xbf16> to vector<32x128xbf16>
    %cst_109 = arith.constant dense<0.000000e+00> : vector<16x128xf32>
    %302 = tpu.matmul %299, %301, %cst_109 {dimension_numbers = #tpu.dot_dimension_numbers<[1], [0], [0], [1], [0, 0, 1, 1], [], []>} : vector<16x32xbf16>, vector<32x128xbf16>, vector<16x128xf32> -> vector<16x128xf32>
    %c1_110 = arith.constant 1 : index
    %c0_111 = arith.constant 0 : index
    %c192_112 = arith.constant 192 : index
    %303 = vector.load %arg5[%c1_110, %c0_111, %c192_112] : memref<2x1x433xf32, #tpu.memory_space<vmem>>, vector<1x1x128xf32>
    %304 = vector.shape_cast %303 : vector<1x1x128xf32> to vector<1x128xf32>
    %305 = vector.broadcast %304 : vector<1x128xf32> to vector<16x128xf32>
    %306 = arith.addf %302, %305 : vector<16x128xf32>
    %cst_113 = arith.constant 0.000000e+00 : f32
    %307 = vector.broadcast %cst_113 : f32 to vector<16x128xf32>
    %308 = arith.maximumf %306, %307 : vector<16x128xf32>
    %309 = arith.truncf %308 : vector<16x128xf32> to vector<16x128xbf16>
    %c1_114 = arith.constant 1 : index
    %c0_115 = arith.constant 0 : index
    %c0_116 = arith.constant 0 : index
    %310 = vector.load %arg4[%c1_114, %c0_115, %c0_116] : memref<2x128x32xbf16, #tpu.memory_space<vmem>>, vector<1x128x32xbf16>
    %311 = vector.shape_cast %310 : vector<1x128x32xbf16> to vector<128x32xbf16>
    %cst_117 = arith.constant dense<0.000000e+00> : vector<16x32xf32>
    %312 = tpu.matmul %309, %311, %cst_117 {dimension_numbers = #tpu.dot_dimension_numbers<[1], [0], [0], [1], [0, 0, 1, 1], [], []>} : vector<16x128xbf16>, vector<128x32xbf16>, vector<16x32xf32> -> vector<16x32xf32>
    %c1_118 = arith.constant 1 : index
    %c0_119 = arith.constant 0 : index
    %c320_120 = arith.constant 320 : index
    %313 = vector.load %arg5[%c1_118, %c0_119, %c320_120] : memref<2x1x433xf32, #tpu.memory_space<vmem>>, vector<1x1x32xf32>
    %314 = vector.shape_cast %313 : vector<1x1x32xf32> to vector<1x32xf32>
    %315 = vector.broadcast %314 : vector<1x32xf32> to vector<16x32xf32>
    %316 = arith.addf %312, %315 : vector<16x32xf32>
    %317 = arith.addf %298, %316 : vector<16x32xf32>
    %c1_121 = arith.constant 1 : index
    %c0_122 = arith.constant 0 : index
    %c352_123 = arith.constant 352 : index
    %318 = vector.load %arg5[%c1_121, %c0_122, %c352_123] : memref<2x1x433xf32, #tpu.memory_space<vmem>>, vector<1x1x32xf32>
    %319 = vector.shape_cast %318 : vector<1x1x32xf32> to vector<1x32xf32>
    %c1_124 = arith.constant 1 : index
    %c0_125 = arith.constant 0 : index
    %c384_126 = arith.constant 384 : index
    %320 = vector.load %arg5[%c1_124, %c0_125, %c384_126] : memref<2x1x433xf32, #tpu.memory_space<vmem>>, vector<1x1x32xf32>
    %321 = vector.shape_cast %320 : vector<1x1x32xf32> to vector<1x32xf32>
    %cst_127 = arith.constant dense<0.000000e+00> : vector<16xf32>
    %322 = vector.multi_reduction <add>, %317, %cst_127 [1] : vector<16x32xf32> to vector<16xf32>
    %323 = vector.shape_cast %322 : vector<16xf32> to vector<16x1xf32>
    %cst_128 = arith.constant 3.200000e+01 : f32
    %324 = vector.broadcast %cst_128 : f32 to vector<16x1xf32>
    %325 = arith.divf %323, %324 : vector<16x1xf32>
    %326 = vector.broadcast %325 : vector<16x1xf32> to vector<16x32xf32>
    %327 = arith.subf %317, %326 : vector<16x32xf32>
    %328 = arith.mulf %327, %327 : vector<16x32xf32>
    %cst_129 = arith.constant dense<0.000000e+00> : vector<16xf32>
    %329 = vector.multi_reduction <add>, %328, %cst_129 [1] : vector<16x32xf32> to vector<16xf32>
    %330 = vector.shape_cast %329 : vector<16xf32> to vector<16x1xf32>
    %cst_130 = arith.constant 3.200000e+01 : f32
    %331 = vector.broadcast %cst_130 : f32 to vector<16x1xf32>
    %332 = arith.divf %330, %331 : vector<16x1xf32>
    %cst_131 = arith.constant 9.99999974E-6 : f32
    %333 = vector.broadcast %cst_131 : f32 to vector<16x1xf32>
    %334 = arith.addf %332, %333 : vector<16x1xf32>
    %335 = math.rsqrt %334 : vector<16x1xf32>
    %336 = vector.broadcast %335 : vector<16x1xf32> to vector<16x32xf32>
    %337 = arith.mulf %327, %336 : vector<16x32xf32>
    %338 = vector.broadcast %319 : vector<1x32xf32> to vector<16x32xf32>
    %339 = arith.mulf %337, %338 : vector<16x32xf32>
    %340 = vector.broadcast %321 : vector<1x32xf32> to vector<16x32xf32>
    %341 = arith.addf %339, %340 : vector<16x32xf32>
    %342 = arith.truncf %341 : vector<16x32xf32> to vector<16x32xbf16>
    %c0_132 = arith.constant 0 : index
    %c0_133 = arith.constant 0 : index
    %343 = vector.load %arg6[%c0_132, %c0_133] : memref<32x16xbf16, #tpu.memory_space<vmem>>, vector<32x16xbf16>
    %cst_134 = arith.constant dense<0.000000e+00> : vector<16x16xf32>
    %344 = tpu.matmul %342, %343, %cst_134 {dimension_numbers = #tpu.dot_dimension_numbers<[1], [0], [0], [1], [0, 0, 1, 1], [], []>} : vector<16x32xbf16>, vector<32x16xbf16>, vector<16x16xf32> -> vector<16x16xf32>
    %c0_135 = arith.constant 0 : index
    %c0_136 = arith.constant 0 : index
    %c416 = arith.constant 416 : index
    %345 = vector.load %arg5[%c0_135, %c0_136, %c416] : memref<2x1x433xf32, #tpu.memory_space<vmem>>, vector<1x1x16xf32>
    %346 = vector.shape_cast %345 : vector<1x1x16xf32> to vector<1x16xf32>
    %347 = vector.broadcast %346 : vector<1x16xf32> to vector<16x16xf32>
    %348 = arith.addf %344, %347 : vector<16x16xf32>
    %349 = math.tanh %348 : vector<16x16xf32>
    %350 = arith.truncf %349 : vector<16x16xf32> to vector<16x16xbf16>
    %c0_137 = arith.constant 0 : index
    %c0_138 = arith.constant 0 : index
    %351 = vector.load %arg7[%c0_137, %c0_138] : memref<16x1xbf16, #tpu.memory_space<vmem>>, vector<16x1xbf16>
    %cst_139 = arith.constant dense<0.000000e+00> : vector<16x1xf32>
    %352 = tpu.matmul %350, %351, %cst_139 {dimension_numbers = #tpu.dot_dimension_numbers<[1], [0], [0], [1], [0, 0, 1, 1], [], []>} : vector<16x16xbf16>, vector<16x1xbf16>, vector<16x1xf32> -> vector<16x1xf32>
    %c0_140 = arith.constant 0 : index
    %c0_141 = arith.constant 0 : index
    %c432 = arith.constant 432 : index
    %353 = vector.load %arg5[%c0_140, %c0_141, %c432] : memref<2x1x433xf32, #tpu.memory_space<vmem>>, vector<1x1x1xf32>
    %354 = vector.shape_cast %353 : vector<1x1x1xf32> to vector<1x1xf32>
    %355 = vector.broadcast %354 : vector<1x1xf32> to vector<16x1xf32>
    %356 = arith.addf %352, %355 : vector<16x1xf32>
    %357 = vector.shape_cast %356 : vector<16x1xf32> to vector<16x1xf32>
    %358 = vector.broadcast %357 : vector<16x1xf32> to vector<16x128xf32>
    %c0_142 = arith.constant 0 : index
    %c0_143 = arith.constant 0 : index
    %359 = vector.load %arg8[%c0_142, %c0_143] : memref<16x128xf32, #tpu.memory_space<vmem>>, vector<16x128xf32>
    tpu.vector_store %arg8[%c0_142, %c0_143], %358 {strides = array<i32>} : memref<16x128xf32, #tpu.memory_space<vmem>>, vector<16x128xf32>,
    return
  }
}

</mosaic_0001>

<llo_original>
// kernel: tpu_custom_call.1
$region0: #{tpu_custom_call.1}
  #allocation0 [shape = 'u32[]', space=smem, size = 0x4, offset = 0x4, fixed_abs, tag = 'smem constant byte address 0x4 - core index']
  #allocation1 [shape = 'u32[72,128]{1,0:T(1,128)}', space=vmem, size = 0x9000, scoped, tag = 'internal scratch']
  %s0 = inlined_call_operand.vmem [shape: bf16[16,16], index: 0, kind: input, shape index: {}]
  %s1 = inlined_call_operand.vmem [shape: f32[16,48], index: 1, kind: input, shape index: {}]
  %s2 = inlined_call_operand.vmem [shape: bf16[16,32], index: 2, kind: input, shape index: {}]
  %s3 = inlined_call_operand.vmem [shape: bf16[2,32,256], index: 3, kind: input, shape index: {}]
  %s4 = inlined_call_operand.vmem [shape: bf16[2,128,32], index: 4, kind: input, shape index: {}]
  %s5 = inlined_call_operand.vmem [shape: f32[2,1,433], index: 5, kind: input, shape index: {}]
  %s6 = inlined_call_operand.vmem [shape: bf16[32,16], index: 6, kind: input, shape index: {}]
  %s7 = inlined_call_operand.vmem [shape: bf16[16,1], index: 7, kind: input, shape index: {}]
  %s8 = inlined_call_operand.hbm [shape: f32[16,128], index: 8, kind: output, shape index: {}]
  %s9 = sld [smem:[#allocation0]]
  $region42: #{tpu_custom_call.1} parent=0
    _
  %s11 = ssub.s32 1, %s9
  %s12 = scalar_select 0, %s11, %s9
  $region1: #{tpu_custom_call.1} parent=0
    #allocation2 [shape = 'u8[8192]{0}', space=vmem, size = 0x2000, scoped, tag = 'output window, operand 0, single buffered']
    #allocation3 [shape = 's32[1]{0}', space=sflag, size = 0x4, scoped, tag = 'scoped memory for tpu_custom_call.1']
    %13 = vsyncpa [#allocation3], 0
    // Predicated region
    $region2: #{tpu_custom_call.1} parent=1 // pred_check
      _
    $region3: #{tpu_custom_call.1} parent=1 // pred_check_branch
      %15 = sbr.rel (0) target = $region5
    $region4: #{tpu_custom_call.1} parent=1 // pred_region
      _
    $region5: #{tpu_custom_call.1} parent=1 // pred_fallthru
      _
    // Predicated region
    $region6: #{tpu_custom_call.1} parent=1 // pred_check
      _
    $region7: #{tpu_custom_call.1} parent=1 // pred_check_branch
      %17 = sbr.rel (0) target = $region9
    $region8: #{tpu_custom_call.1} parent=1 // pred_region
      _
    $region9: #{tpu_custom_call.1} parent=1 // pred_fallthru
      _
    // Predicated region
    $region10: #{tpu_custom_call.1} parent=1 // pred_check
      _
    $region11: #{tpu_custom_call.1} parent=1 // pred_check_branch
      %19 = sbr.rel (0) target = $region13
    $region12: #{tpu_custom_call.1} parent=1 // pred_region
      _
    $region13: #{tpu_custom_call.1} parent=1 // pred_fallthru
      _
    // Predicated region
    $region14: #{tpu_custom_call.1} parent=1 // pred_check
      _
    $region15: #{tpu_custom_call.1} parent=1 // pred_check_branch
      %21 = sbr.rel (0) target = $region17
    $region16: #{tpu_custom_call.1} parent=1 // pred_region
      _
    $region17: #{tpu_custom_call.1} parent=1 // pred_fallthru
      _
    // Predicated region
    $region18: #{tpu_custom_call.1} parent=1 // pred_check
      _
    $region19: #{tpu_custom_call.1} parent=1 // pred_check_branch
      %23 = sbr.rel (0) target = $region21
    $region20: #{tpu_custom_call.1} parent=1 // pred_region
      _
    $region21: #{tpu_custom_call.1} parent=1 // pred_fallthru
      _
    // Predicated region
    $region22: #{tpu_custom_call.1} parent=1 // pred_check
      _
    $region23: #{tpu_custom_call.1} parent=1 // pred_check_branch
      %25 = sbr.rel (0) target = $region25
    $region24: #{tpu_custom_call.1} parent=1 // pred_region
      _
    $region25: #{tpu_custom_call.1} parent=1 // pred_fallthru
      _
    // Predicated region
    $region26: #{tpu_custom_call.1} parent=1 // pred_check
      _
    $region27: #{tpu_custom_call.1} parent=1 // pred_check_branch
      %27 = sbr.rel (0) target = $region29
    $region28: #{tpu_custom_call.1} parent=1 // pred_region
      _
    $region29: #{tpu_custom_call.1} parent=1 // pred_fallthru
      _
    // Predicated region
    $region30: #{tpu_custom_call.1} parent=1 // pred_check
      _
    $region31: #{tpu_custom_call.1} parent=1 // pred_check_branch
      %29 = sbr.rel (0) target = $region33
    $region32: #{tpu_custom_call.1} parent=1 // pred_region
      _
    $region33: #{tpu_custom_call.1} parent=1 // pred_fallthru
      _
    %v31 = vld [vmem:[%s1] sm:$0xff]
    %v32 = vld [vmem:[%s1 + $0x8] sm:$0xff]
    %v33 = vld [vmem:[%s0] sm:$0xf]
    %v34 = vld [vmem:[%s0 + $0x4] sm:$0xf]
    %v35 = vld [vmem:[%s2] sm:$0xf]
    %v36 = vld [vmem:[%s2 + $0x4] sm:$0xf]
    %v39 = vunpack.c.l.b16 %v33
    %v40 = vunpack.c.l.b16 %v34
    %v41 = vpack.c.b16 %v40, %v39
    %v44 = vunpack.c.l.b16 %v35
    %v45 = vunpack.c.l.b16 %v36
    %v46 = vpack.c.b16 %v45, %v44
    %vm48 = vcmask 130048
    %v50 = vsel %vm48, %v41, 0
    %52 = vmatpush.bf16.msra.mxu0 0
    %53 = vmatpush.bf16.msra.mxu0 0
    %54 = vmatpush.bf16.msra.mxu0 0
    %55 = vmatpush.bf16.msra.mxu0 0
    %56 = vmatpush.bf16.msra.mxu0 0
    %57 = vmatpush.bf16.msra.mxu0 0
    %58 = vmatpush.bf16.msra.mxu0 0
    %59 = vmatpush.bf16.msra.mxu0 %v46
    %60 = vmatmul.bf16.gmra.mxu0 %v50
    %v61 = vpop.f32.mrf.mxu0
    %v62 = vadd.f32 %v31, %v61
    %v63 = vpop.f32.mrf.mxu0
    %v64 = vadd.f32 %v32, %v63
    %65 = vdwg.mxu0
    %v66 = vpack.c.bf16 %v64, %v62
    %v67 = vld [vmem:[%s3] sm:$0xf]
    %v68 = vld [vmem:[%s3 + $0x8] sm:$0xf]
    %v69 = vld [vmem:[%s3 + $0x10] sm:$0xf]
    %v70 = vld [vmem:[%s3 + $0x18] sm:$0xf]
    %v71 = vld [vmem:[%s5] sm:$0x1]
    %v73 = vperm.slane %v71, 0
    %v79 = vunpack.c.l.b16 %v67
    %v80 = vunpack.c.l.b16 %v68
    %v81 = vunpack.c.l.b16 %v69
    %v82 = vunpack.c.l.b16 %v70
    %v83 = vpack.c.b16 %v80, %v79
    %v84 = vpack.c.b16 %v82, %v81
    %vm87 = vcmask 261120
    %v89 = vsel %vm87, %v66, 0
    %91 = vmatpush.bf16.msra.mxu0 0
    %92 = vmatpush.bf16.msra.mxu0 0
    %93 = vmatpush.bf16.msra.mxu0 0
    %94 = vmatpush.bf16.msra.mxu0 0
    %95 = vmatpush.bf16.msra.mxu0 0
    %96 = vmatpush.bf16.msra.mxu0 0
    %97 = vmatpush.bf16.msra.mxu0 %v84
    %98 = vmatpush.bf16.msra.mxu0 %v83
    %99 = vmatmul.bf16.gmra.mxu0 %v89
    %v100 = vpop.f32.mrf.mxu0
    %v101 = vadd.f32 %v73, %v100
    %v102 = vpop.f32.mrf.mxu0
    %v103 = vadd.f32 %v73, %v102
    %104 = vdwg.mxu0
    %v105 = vpack.c.bf16 %v103, %v101
    %107 = vrot.lane.b32.xlu0 %v105, 96
    %v108 = vpop.permute.xlu0 %107
    %111 = vrot.lane.b32.xlu0 %v31, 96
    %v112 = vpop.permute.xlu0 %111
    %113 = vrot.lane.b32.xlu0 %v32, 96
    %v114 = vpop.permute.xlu0 %113
    %vm117 = vcmask 64512
    %v119 = vsel %vm117, %v105, 0
    %v122 = vsel %vm117, %v108, 0
    %124 = vmatpush.bf16.xpose.msra.mxu0 0
    %125 = vmatpush.bf16.xpose.msra.mxu0 0
    %126 = vmatpush.bf16.xpose.msra.mxu0 0
    %127 = vmatpush.bf16.xpose.msra.mxu0 0
    %128 = vmatpush.bf16.xpose.msra.mxu0 0
    %129 = vmatpush.bf16.xpose.msra.mxu0 0
    %130 = vmatpush.bf16.xpose.msra.mxu0 0
    %131 = vmatpush.bf16.xpose.msra.mxu0 %v122
    %132 = vmatmul.bf16.gmra.mxu0 %v119
    %v133 = vpop.f32.mrf.mxu0
    %v134 = vadd.f32 %v112, %v133
    %v135 = vpop.f32.mrf.mxu0
    %v136 = vadd.f32 %v114, %v135
    %137 = vdwg.mxu0
    %v138 = vsel %vm48, %v134, -inf
    %139 = vmax.xlane.f32.xlu0 %v138
    %v140 = vpop.xlane.xlu0 %139
    %v141 = vsel %vm48, %v136, -inf
    %142 = vmax.xlane.f32.xlu0 %v141
    %v143 = vpop.xlane.xlu0 %142
    %v144 = vsub.f32 %v134, %v140
    %v145 = vsub.f32 %v136, %v143
    %v146 = vmul.f32 %v144, 1.442695
    %v147 = vpow.pop %v146
    %v148 = vmul.f32 %v145, 1.442695
    %v149 = vpow.pop %v148
    %v150 = vsel %vm48, %v147, 0.0
    %151 = vadd.xlane.f32.xlu0 %v150
    %v152 = vpop.xlane.xlu0 %151
    %v153 = vsel %vm48, %v149, 0.0
    %154 = vadd.xlane.f32.xlu0 %v153
    %v155 = vpop.xlane.xlu0 %154
    %v156 = vrcp.pop %v152
    %v157 = vrcp.pop %v155
    %v158 = vmul.f32 %v147, %v156
    %v159 = vmul.f32 %v149, %v157
    %v160 = vpack.c.bf16 %v159, %v158
    %161 = vrot.lane.b32.xlu0 %v105, 64
    %v162 = vpop.permute.xlu0 %161
    %v165 = vsel %vm48, %v160, 0
    %167 = vmatpush.bf16.msra.mxu0 0
    %168 = vmatpush.bf16.msra.mxu0 0
    %169 = vmatpush.bf16.msra.mxu0 0
    %170 = vmatpush.bf16.msra.mxu0 0
    %171 = vmatpush.bf16.msra.mxu0 0
    %172 = vmatpush.bf16.msra.mxu0 0
    %173 = vmatpush.bf16.msra.mxu0 0
    %174 = vmatpush.bf16.msra.mxu0 %v162
    %175 = vmatmul.bf16.gmra.mxu0 %v165
    %v176 = vpop.f32.mrf.mxu0
    %v177 = vadd.f32 0.0, %v176
    %v178 = vpop.f32.mrf.mxu0
    %v179 = vadd.f32 0.0, %v178
    %180 = vdwg.mxu0
    %v181 = vpack.c.bf16 %v177, %v177
    %v182 = vpack.c.bf16 %v179, %v179
    %183 = vrot.lane.b32.xlu0 %v105, 120
    %v184 = vpop.permute.xlu0 %183
    %185 = vrot.lane.b32.xlu0 %v105, 88
    %v186 = vpop.permute.xlu0 %185
    %v188 = vsel %vm117, %v184, 0
    %v191 = vsel %vm117, %v186, 0
    %193 = vmatpush.bf16.xpose.msra.mxu0 0
    %194 = vmatpush.bf16.xpose.msra.mxu0 0
    %195 = vmatpush.bf16.xpose.msra.mxu0 0
    %196 = vmatpush.bf16.xpose.msra.mxu0 0
    %197 = vmatpush.bf16.xpose.msra.mxu0 0
    %198 = vmatpush.bf16.xpose.msra.mxu0 0
    %199 = vmatpush.bf16.xpose.msra.mxu0 0
    %200 = vmatpush.bf16.xpose.msra.mxu0 %v191
    %201 = vmatmul.bf16.gmra.mxu0 %v188
    %v202 = vpop.f32.mrf.mxu0
    %v203 = vadd.f32 %v112, %v202
    %v204 = vpop.f32.mrf.mxu0
    %v205 = vadd.f32 %v114, %v204
    %206 = vdwg.mxu0
    %v207 = vsel %vm48, %v203, -inf
    %208 = vmax.xlane.f32.xlu0 %v207
    %v209 = vpop.xlane.xlu0 %208
    %v210 = vsel %vm48, %v205, -inf
    %211 = vmax.xlane.f32.xlu0 %v210
    %v212 = vpop.xlane.xlu0 %211
    %v213 = vsub.f32 %v203, %v209
    %v214 = vsub.f32 %v205, %v212
    %v215 = vmul.f32 %v213, 1.442695
    %v216 = vpow.pop %v215
    %v217 = vmul.f32 %v214, 1.442695
    %v218 = vpow.pop %v217
    %v219 = vsel %vm48, %v216, 0.0
    %220 = vadd.xlane.f32.xlu0 %v219
    %v221 = vpop.xlane.xlu0 %220
    %v222 = vsel %vm48, %v218, 0.0
    %223 = vadd.xlane.f32.xlu0 %v222
    %v224 = vpop.xlane.xlu0 %223
    %v225 = vrcp.pop %v221
    %v226 = vrcp.pop %v224
    %v227 = vmul.f32 %v216, %v225
    %v228 = vmul.f32 %v218, %v226
    %v229 = vpack.c.bf16 %v228, %v227
    %230 = vrot.lane.b32.xlu0 %v105, 56
    %v231 = vpop.permute.xlu0 %230
    %v234 = vsel %vm48, %v229, 0
    %236 = vmatpush.bf16.msra.mxu0 0
    %237 = vmatpush.bf16.msra.mxu0 0
    %238 = vmatpush.bf16.msra.mxu0 0
    %239 = vmatpush.bf16.msra.mxu0 0
    %240 = vmatpush.bf16.msra.mxu0 0
    %241 = vmatpush.bf16.msra.mxu0 0
    %242 = vmatpush.bf16.msra.mxu0 0
    %243 = vmatpush.bf16.msra.mxu0 %v231
    %244 = vmatmul.bf16.gmra.mxu0 %v234
    %v245 = vpop.f32.mrf.mxu0
    %v246 = vadd.f32 0.0, %v245
    %v247 = vpop.f32.mrf.mxu0
    %v248 = vadd.f32 0.0, %v247
    %249 = vdwg.mxu0
    %v250 = vpack.c.bf16 %v246, %v246
    %v251 = vpack.c.bf16 %v248, %v248
    %252 = vrot.lane.b32.xlu0 %v105, 112
    %v253 = vpop.permute.xlu0 %252
    %254 = vrot.lane.b32.xlu0 %v105, 80
    %v255 = vpop.permute.xlu0 %254
    %v257 = vsel %vm117, %v253, 0
    %v260 = vsel %vm117, %v255, 0
    %262 = vmatpush.bf16.xpose.msra.mxu0 0
    %263 = vmatpush.bf16.xpose.msra.mxu0 0
    %264 = vmatpush.bf16.xpose.msra.mxu0 0
    %265 = vmatpush.bf16.xpose.msra.mxu0 0
    %266 = vmatpush.bf16.xpose.msra.mxu0 0
    %267 = vmatpush.bf16.xpose.msra.mxu0 0
    %268 = vmatpush.bf16.xpose.msra.mxu0 0
    %269 = vmatpush.bf16.xpose.msra.mxu0 %v260
    %270 = vmatmul.bf16.gmra.mxu0 %v257
    %v271 = vpop.f32.mrf.mxu0
    %v272 = vadd.f32 %v112, %v271
    %v273 = vpop.f32.mrf.mxu0
    %v274 = vadd.f32 %v114, %v273
    %275 = vdwg.mxu0
    %v276 = vsel %vm48, %v272, -inf
    %277 = vmax.xlane.f32.xlu0 %v276
    %v278 = vpop.xlane.xlu0 %277
    %v279 = vsel %vm48, %v274, -inf
    %280 = vmax.xlane.f32.xlu0 %v279
    %v281 = vpop.xlane.xlu0 %280
    %v282 = vsub.f32 %v272, %v278
    %v283 = vsub.f32 %v274, %v281
    %v284 = vmul.f32 %v282, 1.442695
    %v285 = vpow.pop %v284
    %v286 = vmul.f32 %v283, 1.442695
    %v287 = vpow.pop %v286
    %v288 = vsel %vm48, %v285, 0.0
    %289 = vadd.xlane.f32.xlu0 %v288
    %v290 = vpop.xlane.xlu0 %289
    %v291 = vsel %vm48, %v287, 0.0
    %292 = vadd.xlane.f32.xlu0 %v291
    %v293 = vpop.xlane.xlu0 %292
    %v294 = vrcp.pop %v290
    %v295 = vrcp.pop %v293
    %v296 = vmul.f32 %v285, %v294
    %v297 = vmul.f32 %v287, %v295
    %v298 = vpack.c.bf16 %v297, %v296
    %299 = vrot.lane.b32.xlu0 %v105, 48
    %v300 = vpop.permute.xlu0 %299
    %v303 = vsel %vm48, %v298, 0
    %305 = vmatpush.bf16.msra.mxu0 0
    %306 = vmatpush.bf16.msra.mxu0 0
    %307 = vmatpush.bf16.msra.mxu0 0
    %308 = vmatpush.bf16.msra.mxu0 0
    %309 = vmatpush.bf16.msra.mxu0 0
    %310 = vmatpush.bf16.msra.mxu0 0
    %311 = vmatpush.bf16.msra.mxu0 0
    %312 = vmatpush.bf16.msra.mxu0 %v300
    %313 = vmatmul.bf16.gmra.mxu0 %v303
    %v314 = vpop.f32.mrf.mxu0
    %v315 = vadd.f32 0.0, %v314
    %v316 = vpop.f32.mrf.mxu0
    %v317 = vadd.f32 0.0, %v316
    %318 = vdwg.mxu0
    %v319 = vpack.c.bf16 %v315, %v315
    %v320 = vpack.c.bf16 %v317, %v317
    %321 = vrot.lane.b32.xlu0 %v105, 104
    %v322 = vpop.permute.xlu0 %321
    %323 = vrot.lane.b32.xlu0 %v105, 72
    %v324 = vpop.permute.xlu0 %323
    %v326 = vsel %vm117, %v322, 0
    %v329 = vsel %vm117, %v324, 0
    %331 = vmatpush.bf16.xpose.msra.mxu0 0
    %332 = vmatpush.bf16.xpose.msra.mxu0 0
    %333 = vmatpush.bf16.xpose.msra.mxu0 0
    %334 = vmatpush.bf16.xpose.msra.mxu0 0
    %335 = vmatpush.bf16.xpose.msra.mxu0 0
    %336 = vmatpush.bf16.xpose.msra.mxu0 0
    %337 = vmatpush.bf16.xpose.msra.mxu0 0
    %338 = vmatpush.bf16.xpose.msra.mxu0 %v329
    %339 = vmatmul.bf16.gmra.mxu0 %v326
    %v340 = vpop.f32.mrf.mxu0
    %v341 = vadd.f32 %v112, %v340
    %v342 = vpop.f32.mrf.mxu0
    %v343 = vadd.f32 %v114, %v342
    %344 = vdwg.mxu0
    %v345 = vsel %vm48, %v341, -inf
    %346 = vmax.xlane.f32.xlu0 %v345
    %v347 = vpop.xlane.xlu0 %346
    %v348 = vsel %vm48, %v343, -inf
    %349 = vmax.xlane.f32.xlu0 %v348
    %v350 = vpop.xlane.xlu0 %349
    %v351 = vsub.f32 %v341, %v347
    %v352 = vsub.f32 %v343, %v350
    %v353 = vmul.f32 %v351, 1.442695
    %v354 = vpow.pop %v353
    %v355 = vmul.f32 %v352, 1.442695
    %v356 = vpow.pop %v355
    %v357 = vsel %vm48, %v354, 0.0
    %358 = vadd.xlane.f32.xlu0 %v357
    %v359 = vpop.xlane.xlu0 %358
    %v360 = vsel %vm48, %v356, 0.0
    %361 = vadd.xlane.f32.xlu0 %v360
    %v362 = vpop.xlane.xlu0 %361
    %v363 = vrcp.pop %v359
    %v364 = vrcp.pop %v362
    %v365 = vmul.f32 %v354, %v363
    %v366 = vmul.f32 %v356, %v364
    %v367 = vpack.c.bf16 %v366, %v365
    %368 = vrot.lane.b32.xlu0 %v105, 40
    %v369 = vpop.permute.xlu0 %368
    %v372 = vsel %vm48, %v367, 0
    %374 = vmatpush.bf16.msra.mxu0 0
    %375 = vmatpush.bf16.msra.mxu0 0
    %376 = vmatpush.bf16.msra.mxu0 0
    %377 = vmatpush.bf16.msra.mxu0 0
    %378 = vmatpush.bf16.msra.mxu0 0
    %379 = vmatpush.bf16.msra.mxu0 0
    %380 = vmatpush.bf16.msra.mxu0 0
    %381 = vmatpush.bf16.msra.mxu0 %v369
    %382 = vmatmul.bf16.gmra.mxu0 %v372
    %v383 = vpop.f32.mrf.mxu0
    %v384 = vadd.f32 0.0, %v383
    %v385 = vpop.f32.mrf.mxu0
    %v386 = vadd.f32 0.0, %v385
    %387 = vdwg.mxu0
    %v388 = vpack.c.bf16 %v384, %v384
    %v389 = vpack.c.bf16 %v386, %v386
    %v392 = vunpack.c.l.b16 %v181
    %v393 = vunpack.c.l.b16 %v182
    %v394 = vpack.c.b16 %v393, %v392
    %v397 = vunpack.c.l.b16 %v250
    %v398 = vunpack.c.l.b16 %v251
    %v399 = vpack.c.b16 %v398, %v397
    %400 = vrot.lane.b32.xlu0 %v399, 8
    %v401 = vpop.permute.xlu0 %400
    %v404 = vunpack.c.l.b16 %v319
    %v405 = vunpack.c.l.b16 %v320
    %v406 = vpack.c.b16 %v405, %v404
    %407 = vrot.lane.b32.xlu0 %v406, 16
    %v408 = vpop.permute.xlu0 %407
    %v411 = vunpack.c.l.b16 %v388
    %v412 = vunpack.c.l.b16 %v389
    %v413 = vpack.c.b16 %v412, %v411
    %414 = vrot.lane.b32.xlu0 %v413, 24
    %v415 = vpop.permute.xlu0 %414
    %v418 = vsel %vm117, %v394, %v401
    %v420 = vsel %vm48, %v418, %v408
    %vm421 = vcmask 195584
    %v423 = vsel %vm421, %v420, %v415
    %424 = vrot.lane.b32.xlu0 %v83, 32
    %v425 = vpop.permute.xlu0 %424
    %426 = vrot.lane.b32.xlu0 %v84, 32
    %v427 = vpop.permute.xlu0 %426
    %430 = vrot.lane.b32.xlu0 %v73, 32
    %v431 = vpop.permute.xlu0 %430
    %v433 = vsel %vm87, %v423, 0
    %435 = vmatpush.bf16.msra.mxu0 0
    %436 = vmatpush.bf16.msra.mxu0 0
    %437 = vmatpush.bf16.msra.mxu0 0
    %438 = vmatpush.bf16.msra.mxu0 0
    %439 = vmatpush.bf16.msra.mxu0 0
    %440 = vmatpush.bf16.msra.mxu0 0
    %441 = vmatpush.bf16.msra.mxu0 %v427
    %442 = vmatpush.bf16.msra.mxu0 %v425
    %443 = vmatmul.bf16.gmra.mxu0 %v433
    %v444 = vpop.f32.mrf.mxu0
    %v445 = vadd.f32 %v431, %v444
    %v446 = vpop.f32.mrf.mxu0
    %v447 = vadd.f32 %v431, %v446
    %448 = vdwg.mxu0
    %v449 = vadd.f32 %v62, %v445
    %v450 = vadd.f32 %v64, %v447
    %v451 = vld [vmem:[%s5 + $0x1] sm:$0x1]
    %v452 = vsel %vm87, %v449, 0.0
    %453 = vadd.xlane.f32.xlu0 %v452
    %v454 = vpop.xlane.xlu0 %453
    %v455 = vsel %vm87, %v450, 0.0
    %456 = vadd.xlane.f32.xlu0 %v455
    %v457 = vpop.xlane.xlu0 %456
    %v458 = vrcp.pop 32.0
    %v459 = vmul.f32 32.0, %v458
    %v460 = vsub.f32 1.0, %v459
    %v461 = vmul.f32 %v458, %v460
    %v462 = vadd.f32 %v458, %v461
    %vm463 = vweird.f32 %v458
    %v464 = vsel %vm463, %v458, %v462
    %v465 = vmul.f32 %v454, %v464
    %v466 = vmul.f32 %v457, %v464
    %v467 = vsub.f32 %v449, %v465
    %v468 = vsub.f32 %v450, %v466
    %v469 = vmul.f32 %v467, %v467
    %v470 = vmul.f32 %v468, %v468
    %v471 = vsel %vm87, %v469, 0.0
    %472 = vadd.xlane.f32.xlu0 %v471
    %v473 = vpop.xlane.xlu0 %472
    %v474 = vsel %vm87, %v470, 0.0
    %475 = vadd.xlane.f32.xlu0 %v474
    %v476 = vpop.xlane.xlu0 %475
    %v477 = vmul.f32 %v473, %v464
    %v478 = vmul.f32 %v476, %v464
    %v479 = vadd.f32 %v477, 1e-05
    %v480 = vadd.f32 %v478, 1e-05
    %v481 = vrsqrt.pop %v479
    %v482 = vmul.f32 %v481, %v479
    %v483 = vmul.f32 %v482, %v481
    %v484 = vmul.f32 0.5, %v483
    %v485 = vsub.f32 1.5, %v484
    %v486 = vmul.f32 %v481, %v485
    %vm487 = vweird.f32 %v479
    %vm488 = vweird.f32 %v481
    %vm489 = vmor %vm487, %vm488
    %v490 = vsel %vm489, %v481, %v486
    %v491 = vrsqrt.pop %v480
    %v492 = vmul.f32 %v491, %v480
    %v493 = vmul.f32 %v492, %v491
    %v494 = vmul.f32 0.5, %v493
    %v495 = vsub.f32 1.5, %v494
    %v496 = vmul.f32 %v491, %v495
    %vm497 = vweird.f32 %v480
    %vm498 = vweird.f32 %v491
    %vm499 = vmor %vm497, %vm498
    %v500 = vsel %vm499, %v491, %v496
    %v501 = vmul.f32 %v467, %v490
    %v502 = vmul.f32 %v468, %v500
    %v504 = vperm.slane %v451, 0
    %v506 = vmul.f32 %v501, %v504
    %v507 = vmul.f32 %v502, %v504
    %508 = vrot.lane.b32.xlu0 %v504, 96
    %v509 = vpop.permute.xlu0 %508
    %v511 = vadd.f32 %v506, %v509
    %v512 = vadd.f32 %v507, %v509
    %v513 = vpack.c.bf16 %v512, %v511
    %v514 = vld [vmem:[%s3 + $0x4] sm:$0xf]
    %v515 = vld [vmem:[%s3 + $0xc] sm:$0xf]
    %v516 = vld [vmem:[%s3 + $0x14] sm:$0xf]
    %v517 = vld [vmem:[%s3 + $0x1c] sm:$0xf]
    %v518 = vld [vmem:[%s5 + $0x1] sm:$0x3]
    %v520 = vperm.slane %v518, 0
    %v521 = vperm.slane %v518, 1
    %v526 = vunpack.c.l.b16 %v514
    %v527 = vunpack.c.l.b16 %v515
    %v528 = vunpack.c.l.b16 %v516
    %v529 = vunpack.c.l.b16 %v517
    %v530 = vpack.c.b16 %v527, %v526
    %v531 = vpack.c.b16 %v529, %v528
    %534 = vrot.lane.b32.xlu0 %v520, 64
    %v535 = vpop.permute.xlu0 %534
    %536 = vrot.lane.b32.xlu0 %v521, 64
    %v537 = vpop.permute.xlu0 %536
    %vm538 = vcmask 523264
    %v539 = vsel %vm538, %v535, %v537
    %v542 = vsel %vm87, %v513, 0
    %544 = vmatpush.bf16.msra.mxu0 0
    %545 = vmatpush.bf16.msra.mxu0 0
    %546 = vmatpush.bf16.msra.mxu0 0
    %547 = vmatpush.bf16.msra.mxu0 0
    %548 = vmatpush.bf16.msra.mxu0 0
    %549 = vmatpush.bf16.msra.mxu0 0
    %550 = vmatpush.bf16.msra.mxu0 %v531
    %551 = vmatpush.bf16.msra.mxu0 %v530
    %552 = vmatmul.bf16.gmra.mxu0 %v542
    %v553 = vpop.f32.mrf.mxu0
    %v554 = vadd.f32 %v539, %v553
    %v555 = vpop.f32.mrf.mxu0
    %v556 = vadd.f32 %v539, %v555
    %557 = vdwg.mxu0
    %v558 = vmax.f32 %v554, 0.0
    %v559 = vmax.f32 %v556, 0.0
    %v560 = vpack.c.bf16 %v559, %v558
    %v561 = vld [vmem:[%s4] sm:$0xf]
    %v562 = vld [vmem:[%s4 + $0x4] sm:$0xf]
    %v563 = vld [vmem:[%s4 + $0x8] sm:$0xf]
    %v564 = vld [vmem:[%s4 + $0xc] sm:$0xf]
    %v565 = vld [vmem:[%s4 + $0x10] sm:$0xf]
    %v566 = vld [vmem:[%s4 + $0x14] sm:$0xf]
    %v567 = vld [vmem:[%s4 + $0x18] sm:$0xf]
    %v568 = vld [vmem:[%s4 + $0x1c] sm:$0xf]
    %v569 = vld [vmem:[%s4 + $0x20] sm:$0xf]
    %v570 = vld [vmem:[%s4 + $0x24] sm:$0xf]
    %v571 = vld [vmem:[%s4 + $0x28] sm:$0xf]
    %v572 = vld [vmem:[%s4 + $0x2c] sm:$0xf]
    %v573 = vld [vmem:[%s4 + $0x30] sm:$0xf]
    %v574 = vld [vmem:[%s4 + $0x34] sm:$0xf]
    %v575 = vld [vmem:[%s4 + $0x38] sm:$0xf]
    %v576 = vld [vmem:[%s4 + $0x3c] sm:$0xf]
    %v577 = vld [vmem:[%s5 + $0x2] sm:$0x1]
    %v579 = vperm.slane %v577, 0
    %v596 = vunpack.c.l.b16 %v561
    %v597 = vunpack.c.l.b16 %v562
    %v598 = vunpack.c.l.b16 %v563
    %v599 = vunpack.c.l.b16 %v564
    %v600 = vunpack.c.l.b16 %v565
    %v601 = vunpack.c.l.b16 %v566
    %v602 = vunpack.c.l.b16 %v567
    %v603 = vunpack.c.l.b16 %v568
    %v604 = vunpack.c.l.b16 %v569
    %v605 = vunpack.c.l.b16 %v570
    %v606 = vunpack.c.l.b16 %v571
    %v607 = vunpack.c.l.b16 %v572
    %v608 = vunpack.c.l.b16 %v573
    %v609 = vunpack.c.l.b16 %v574
    %v610 = vunpack.c.l.b16 %v575
    %v611 = vunpack.c.l.b16 %v576
    %v612 = vpack.c.b16 %v597, %v596
    %v613 = vpack.c.b16 %v599, %v598
    %v614 = vpack.c.b16 %v601, %v600
    %v615 = vpack.c.b16 %v603, %v602
    %v616 = vpack.c.b16 %v605, %v604
    %v617 = vpack.c.b16 %v607, %v606
    %v618 = vpack.c.b16 %v609, %v608
    %v619 = vpack.c.b16 %v611, %v610
    %628 = vrot.lane.b32.xlu0 %v579, 64
    %v629 = vpop.permute.xlu0 %628
    %631 = vmatpush.bf16.msra.mxu0 %v619
    %632 = vmatpush.bf16.msra.mxu0 %v618
    %633 = vmatpush.bf16.msra.mxu0 %v617
    %634 = vmatpush.bf16.msra.mxu0 %v616
    %635 = vmatpush.bf16.msra.mxu0 %v615
    %636 = vmatpush.bf16.msra.mxu0 %v614
    %637 = vmatpush.bf16.msra.mxu0 %v613
    %638 = vmatpush.bf16.msra.mxu0 %v612
    %639 = vmatmul.bf16.gmra.mxu0 %v560
    %v640 = vpop.f32.mrf.mxu0
    %v641 = vadd.f32 %v629, %v640
    %v642 = vpop.f32.mrf.mxu0
    %v643 = vadd.f32 %v629, %v642
    %644 = vdwg.mxu0
    %v645 = vadd.f32 %v511, %v641
    %v646 = vadd.f32 %v512, %v643
    %v647 = vld [vmem:[%s5 + $0x3] sm:$0x1]
    %v648 = vsel %vm87, %v645, 0.0
    %649 = vadd.xlane.f32.xlu0 %v648
    %v650 = vpop.xlane.xlu0 %649
    %v651 = vsel %vm87, %v646, 0.0
    %652 = vadd.xlane.f32.xlu0 %v651
    %v653 = vpop.xlane.xlu0 %652
    %v654 = vmul.f32 %v650, %v464
    %v655 = vmul.f32 %v653, %v464
    %v656 = vsub.f32 %v645, %v654
    %v657 = vsub.f32 %v646, %v655
    %v658 = vmul.f32 %v656, %v656
    %v659 = vmul.f32 %v657, %v657
    %v660 = vsel %vm87, %v658, 0.0
    %661 = vadd.xlane.f32.xlu0 %v660
    %v662 = vpop.xlane.xlu0 %661
    %v663 = vsel %vm87, %v659, 0.0
    %664 = vadd.xlane.f32.xlu0 %v663
    %v665 = vpop.xlane.xlu0 %664
    %v666 = vmul.f32 %v662, %v464
    %v667 = vmul.f32 %v665, %v464
    %v668 = vadd.f32 %v666, 1e-05
    %v669 = vadd.f32 %v667, 1e-05
    %v670 = vrsqrt.pop %v668
    %v671 = vmul.f32 %v670, %v668
    %v672 = vmul.f32 %v671, %v670
    %v673 = vmul.f32 0.5, %v672
    %v674 = vsub.f32 1.5, %v673
    %v675 = vmul.f32 %v670, %v674
    %vm676 = vweird.f32 %v668
    %vm677 = vweird.f32 %v670
    %vm678 = vmor %vm676, %vm677
    %v679 = vsel %vm678, %v670, %v675
    %v680 = vrsqrt.pop %v669
    %v681 = vmul.f32 %v680, %v669
    %v682 = vmul.f32 %v681, %v680
    %v683 = vmul.f32 0.5, %v682
    %v684 = vsub.f32 1.5, %v683
    %v685 = vmul.f32 %v680, %v684
    %vm686 = vweird.f32 %v669
    %vm687 = vweird.f32 %v680
    %vm688 = vmor %vm686, %vm687
    %v689 = vsel %vm688, %v680, %v685
    %v690 = vmul.f32 %v656, %v679
    %v691 = vmul.f32 %v657, %v689
    %692 = vrot.lane.b32.xlu0 %v579, 32
    %v693 = vpop.permute.xlu0 %692
    %v695 = vmul.f32 %v690, %v693
    %v696 = vmul.f32 %v691, %v693
    %v698 = vperm.slane %v647, 0
    %v700 = vadd.f32 %v695, %v698
    %v701 = vadd.f32 %v696, %v698
    %v702 = vpack.c.bf16 %v701, %v700
    %s703 = scalar_lea.vmem %s3, 32
    %v704 = vld [vmem:[%s703] sm:$0xf]
    %v705 = vld [vmem:[%s703 + $0x8] sm:$0xf]
    %v706 = vld [vmem:[%s703 + $0x10] sm:$0xf]
    %v707 = vld [vmem:[%s703 + $0x18] sm:$0xf]
    %s708 = scalar_lea.vmem %s5, 4
    %v709 = vld [vmem:[%s708] sm:$0x1]
    %v711 = vperm.slane %v709, 0
    %v717 = vunpack.c.l.b16 %v704
    %v718 = vunpack.c.l.b16 %v705
    %v719 = vunpack.c.l.b16 %v706
    %v720 = vunpack.c.l.b16 %v707
    %v721 = vpack.c.b16 %v718, %v717
    %v722 = vpack.c.b16 %v720, %v719
    %v726 = vsel %vm87, %v702, 0
    %728 = vmatpush.bf16.msra.mxu0 0
    %729 = vmatpush.bf16.msra.mxu0 0
    %730 = vmatpush.bf16.msra.mxu0 0
    %731 = vmatpush.bf16.msra.mxu0 0
    %732 = vmatpush.bf16.msra.mxu0 0
    %733 = vmatpush.bf16.msra.mxu0 0
    %734 = vmatpush.bf16.msra.mxu0 %v722
    %735 = vmatpush.bf16.msra.mxu0 %v721
    %736 = vmatmul.bf16.gmra.mxu0 %v726
    %v737 = vpop.f32.mrf.mxu0
    %v738 = vadd.f32 %v711, %v737
    %v739 = vpop.f32.mrf.mxu0
    %v740 = vadd.f32 %v711, %v739
    %741 = vdwg.mxu0
    %v742 = vpack.c.bf16 %v740, %v738
    %744 = vrot.lane.b32.xlu0 %v742, 96
    %v745 = vpop.permute.xlu0 %744
    %v747 = vsel %vm117, %v742, 0
    %v750 = vsel %vm117, %v745, 0
    %752 = vmatpush.bf16.xpose.msra.mxu0 0
    %753 = vmatpush.bf16.xpose.msra.mxu0 0
    %754 = vmatpush.bf16.xpose.msra.mxu0 0
    %755 = vmatpush.bf16.xpose.msra.mxu0 0
    %756 = vmatpush.bf16.xpose.msra.mxu0 0
    %757 = vmatpush.bf16.xpose.msra.mxu0 0
    %758 = vmatpush.bf16.xpose.msra.mxu0 0
    %759 = vmatpush.bf16.xpose.msra.mxu0 %v750
    %760 = vmatmul.bf16.gmra.mxu0 %v747
    %v761 = vpop.f32.mrf.mxu0
    %v762 = vadd.f32 %v112, %v761
    %v763 = vpop.f32.mrf.mxu0
    %v764 = vadd.f32 %v114, %v763
    %765 = vdwg.mxu0
    %v766 = vsel %vm48, %v762, -inf
    %767 = vmax.xlane.f32.xlu0 %v766
    %v768 = vpop.xlane.xlu0 %767
    %v769 = vsel %vm48, %v764, -inf
    %770 = vmax.xlane.f32.xlu0 %v769
    %v771 = vpop.xlane.xlu0 %770
    %v772 = vsub.f32 %v762, %v768
    %v773 = vsub.f32 %v764, %v771
    %v774 = vmul.f32 %v772, 1.442695
    %v775 = vpow.pop %v774
    %v776 = vmul.f32 %v773, 1.442695
    %v777 = vpow.pop %v776
    %v778 = vsel %vm48, %v775, 0.0
    %779 = vadd.xlane.f32.xlu0 %v778
    %v780 = vpop.xlane.xlu0 %779
    %v781 = vsel %vm48, %v777, 0.0
    %782 = vadd.xlane.f32.xlu0 %v781
    %v783 = vpop.xlane.xlu0 %782
    %v784 = vrcp.pop %v780
    %v785 = vrcp.pop %v783
    %v786 = vmul.f32 %v775, %v784
    %v787 = vmul.f32 %v777, %v785
    %v788 = vpack.c.bf16 %v787, %v786
    %789 = vrot.lane.b32.xlu0 %v742, 64
    %v790 = vpop.permute.xlu0 %789
    %v793 = vsel %vm48, %v788, 0
    %795 = vmatpush.bf16.msra.mxu0 0
    %796 = vmatpush.bf16.msra.mxu0 0
    %797 = vmatpush.bf16.msra.mxu0 0
    %798 = vmatpush.bf16.msra.mxu0 0
    %799 = vmatpush.bf16.msra.mxu0 0
    %800 = vmatpush.bf16.msra.mxu0 0
    %801 = vmatpush.bf16.msra.mxu0 0
    %802 = vmatpush.bf16.msra.mxu0 %v790
    %803 = vmatmul.bf16.gmra.mxu0 %v793
    %v804 = vpop.f32.mrf.mxu0
    %v805 = vadd.f32 0.0, %v804
    %v806 = vpop.f32.mrf.mxu0
    %v807 = vadd.f32 0.0, %v806
    %808 = vdwg.mxu0
    %v809 = vpack.c.bf16 %v805, %v805
    %v810 = vpack.c.bf16 %v807, %v807
    %811 = vrot.lane.b32.xlu0 %v742, 120
    %v812 = vpop.permute.xlu0 %811
    %813 = vrot.lane.b32.xlu0 %v742, 88
    %v814 = vpop.permute.xlu0 %813
    %v816 = vsel %vm117, %v812, 0
    %v819 = vsel %vm117, %v814, 0
    %821 = vmatpush.bf16.xpose.msra.mxu0 0
    %822 = vmatpush.bf16.xpose.msra.mxu0 0
    %823 = vmatpush.bf16.xpose.msra.mxu0 0
    %824 = vmatpush.bf16.xpose.msra.mxu0 0
    %825 = vmatpush.bf16.xpose.msra.mxu0 0
    %826 = vmatpush.bf16.xpose.msra.mxu0 0
    %827 = vmatpush.bf16.xpose.msra.mxu0 0
    %828 = vmatpush.bf16.xpose.msra.mxu0 %v819
    %829 = vmatmul.bf16.gmra.mxu0 %v816
    %v830 = vpop.f32.mrf.mxu0
    %v831 = vadd.f32 %v112, %v830
    %v832 = vpop.f32.mrf.mxu0
    %v833 = vadd.f32 %v114, %v832
    %834 = vdwg.mxu0
    %v835 = vsel %vm48, %v831, -inf
    %836 = vmax.xlane.f32.xlu0 %v835
    %v837 = vpop.xlane.xlu0 %836
    %v838 = vsel %vm48, %v833, -inf
    %839 = vmax.xlane.f32.xlu0 %v838
    %v840 = vpop.xlane.xlu0 %839
    %v841 = vsub.f32 %v831, %v837
    %v842 = vsub.f32 %v833, %v840
    %v843 = vmul.f32 %v841, 1.442695
    %v844 = vpow.pop %v843
    %v845 = vmul.f32 %v842, 1.442695
    %v846 = vpow.pop %v845
    %v847 = vsel %vm48, %v844, 0.0
    %848 = vadd.xlane.f32.xlu0 %v847
    %v849 = vpop.xlane.xlu0 %848
    %v850 = vsel %vm48, %v846, 0.0
    %851 = vadd.xlane.f32.xlu0 %v850
    %v852 = vpop.xlane.xlu0 %851
    %v853 = vrcp.pop %v849
    %v854 = vrcp.pop %v852
    %v855 = vmul.f32 %v844, %v853
    %v856 = vmul.f32 %v846, %v854
    %v857 = vpack.c.bf16 %v856, %v855
    %858 = vrot.lane.b32.xlu0 %v742, 56
    %v859 = vpop.permute.xlu0 %858
    %v862 = vsel %vm48, %v857, 0
    %864 = vmatpush.bf16.msra.mxu0 0
    %865 = vmatpush.bf16.msra.mxu0 0
    %866 = vmatpush.bf16.msra.mxu0 0
    %867 = vmatpush.bf16.msra.mxu0 0
    %868 = vmatpush.bf16.msra.mxu0 0
    %869 = vmatpush.bf16.msra.mxu0 0
    %870 = vmatpush.bf16.msra.mxu0 0
    %871 = vmatpush.bf16.msra.mxu0 %v859
    %872 = vmatmul.bf16.gmra.mxu0 %v862
    %v873 = vpop.f32.mrf.mxu0
    %v874 = vadd.f32 0.0, %v873
    %v875 = vpop.f32.mrf.mxu0
    %v876 = vadd.f32 0.0, %v875
    %877 = vdwg.mxu0
    %v878 = vpack.c.bf16 %v874, %v874
    %v879 = vpack.c.bf16 %v876, %v876
    %880 = vrot.lane.b32.xlu0 %v742, 112
    %v881 = vpop.permute.xlu0 %880
    %882 = vrot.lane.b32.xlu0 %v742, 80
    %v883 = vpop.permute.xlu0 %882
    %v885 = vsel %vm117, %v881, 0
    %v888 = vsel %vm117, %v883, 0
    %890 = vmatpush.bf16.xpose.msra.mxu0 0
    %891 = vmatpush.bf16.xpose.msra.mxu0 0
    %892 = vmatpush.bf16.xpose.msra.mxu0 0
    %893 = vmatpush.bf16.xpose.msra.mxu0 0
    %894 = vmatpush.bf16.xpose.msra.mxu0 0
    %895 = vmatpush.bf16.xpose.msra.mxu0 0
    %896 = vmatpush.bf16.xpose.msra.mxu0 0
    %897 = vmatpush.bf16.xpose.msra.mxu0 %v888
    %898 = vmatmul.bf16.gmra.mxu0 %v885
    %v899 = vpop.f32.mrf.mxu0
    %v900 = vadd.f32 %v112, %v899
    %v901 = vpop.f32.mrf.mxu0
    %v902 = vadd.f32 %v114, %v901
    %903 = vdwg.mxu0
    %v904 = vsel %vm48, %v900, -inf
    %905 = vmax.xlane.f32.xlu0 %v904
    %v906 = vpop.xlane.xlu0 %905
    %v907 = vsel %vm48, %v902, -inf
    %908 = vmax.xlane.f32.xlu0 %v907
    %v909 = vpop.xlane.xlu0 %908
    %v910 = vsub.f32 %v900, %v906
    %v911 = vsub.f32 %v902, %v909
    %v912 = vmul.f32 %v910, 1.442695
    %v913 = vpow.pop %v912
    %v914 = vmul.f32 %v911, 1.442695
    %v915 = vpow.pop %v914
    %v916 = vsel %vm48, %v913, 0.0
    %917 = vadd.xlane.f32.xlu0 %v916
    %v918 = vpop.xlane.xlu0 %917
    %v919 = vsel %vm48, %v915, 0.0
    %920 = vadd.xlane.f32.xlu0 %v919
    %v921 = vpop.xlane.xlu0 %920
    %v922 = vrcp.pop %v918
    %v923 = vrcp.pop %v921
    %v924 = vmul.f32 %v913, %v922
    %v925 = vmul.f32 %v915, %v923
    %v926 = vpack.c.bf16 %v925, %v924
    %927 = vrot.lane.b32.xlu0 %v742, 48
    %v928 = vpop.permute.xlu0 %927
    %v931 = vsel %vm48, %v926, 0
    %933 = vmatpush.bf16.msra.mxu0 0
    %934 = vmatpush.bf16.msra.mxu0 0
    %935 = vmatpush.bf16.msra.mxu0 0
    %936 = vmatpush.bf16.msra.mxu0 0
    %937 = vmatpush.bf16.msra.mxu0 0
    %938 = vmatpush.bf16.msra.mxu0 0
    %939 = vmatpush.bf16.msra.mxu0 0
    %940 = vmatpush.bf16.msra.mxu0 %v928
    %941 = vmatmul.bf16.gmra.mxu0 %v931
    %v942 = vpop.f32.mrf.mxu0
    %v943 = vadd.f32 0.0, %v942
    %v944 = vpop.f32.mrf.mxu0
    %v945 = vadd.f32 0.0, %v944
    %946 = vdwg.mxu0
    %v947 = vpack.c.bf16 %v943, %v943
    %v948 = vpack.c.bf16 %v945, %v945
    %949 = vrot.lane.b32.xlu0 %v742, 104
    %v950 = vpop.permute.xlu0 %949
    %951 = vrot.lane.b32.xlu0 %v742, 72
    %v952 = vpop.permute.xlu0 %951
    %v954 = vsel %vm117, %v950, 0
    %v957 = vsel %vm117, %v952, 0
    %959 = vmatpush.bf16.xpose.msra.mxu0 0
    %960 = vmatpush.bf16.xpose.msra.mxu0 0
    %961 = vmatpush.bf16.xpose.msra.mxu0 0
    %962 = vmatpush.bf16.xpose.msra.mxu0 0
    %963 = vmatpush.bf16.xpose.msra.mxu0 0
    %964 = vmatpush.bf16.xpose.msra.mxu0 0
    %965 = vmatpush.bf16.xpose.msra.mxu0 0
    %966 = vmatpush.bf16.xpose.msra.mxu0 %v957
    %967 = vmatmul.bf16.gmra.mxu0 %v954
    %v968 = vpop.f32.mrf.mxu0
    %v969 = vadd.f32 %v112, %v968
    %v970 = vpop.f32.mrf.mxu0
    %v971 = vadd.f32 %v114, %v970
    %972 = vdwg.mxu0
    %v973 = vsel %vm48, %v969, -inf
    %974 = vmax.xlane.f32.xlu0 %v973
    %v975 = vpop.xlane.xlu0 %974
    %v976 = vsel %vm48, %v971, -inf
    %977 = vmax.xlane.f32.xlu0 %v976
    %v978 = vpop.xlane.xlu0 %977
    %v979 = vsub.f32 %v969, %v975
    %v980 = vsub.f32 %v971, %v978
    %v981 = vmul.f32 %v979, 1.442695
    %v982 = vpow.pop %v981
    %v983 = vmul.f32 %v980, 1.442695
    %v984 = vpow.pop %v983
    %v985 = vsel %vm48, %v982, 0.0
    %986 = vadd.xlane.f32.xlu0 %v985
    %v987 = vpop.xlane.xlu0 %986
    %v988 = vsel %vm48, %v984, 0.0
    %989 = vadd.xlane.f32.xlu0 %v988
    %v990 = vpop.xlane.xlu0 %989
    %v991 = vrcp.pop %v987
    %v992 = vrcp.pop %v990
    %v993 = vmul.f32 %v982, %v991
    %v994 = vmul.f32 %v984, %v992
    %v995 = vpack.c.bf16 %v994, %v993
    %996 = vrot.lane.b32.xlu0 %v742, 40
    %v997 = vpop.permute.xlu0 %996
    %v1000 = vsel %vm48, %v995, 0
    %1002 = vmatpush.bf16.msra.mxu0 0
    %1003 = vmatpush.bf16.msra.mxu0 0
    %1004 = vmatpush.bf16.msra.mxu0 0
    %1005 = vmatpush.bf16.msra.mxu0 0
    %1006 = vmatpush.bf16.msra.mxu0 0
    %1007 = vmatpush.bf16.msra.mxu0 0
    %1008 = vmatpush.bf16.msra.mxu0 0
    %1009 = vmatpush.bf16.msra.mxu0 %v997
    %1010 = vmatmul.bf16.gmra.mxu0 %v1000
    %v1011 = vpop.f32.mrf.mxu0
    %v1012 = vadd.f32 0.0, %v1011
    %v1013 = vpop.f32.mrf.mxu0
    %v1014 = vadd.f32 0.0, %v1013
    %1015 = vdwg.mxu0
    %v1016 = vpack.c.bf16 %v1012, %v1012
    %v1017 = vpack.c.bf16 %v1014, %v1014
    %v1020 = vunpack.c.l.b16 %v809
    %v1021 = vunpack.c.l.b16 %v810
    %v1022 = vpack.c.b16 %v1021, %v1020
    %v1025 = vunpack.c.l.b16 %v878
    %v1026 = vunpack.c.l.b16 %v879
    %v1027 = vpack.c.b16 %v1026, %v1025
    %1028 = vrot.lane.b32.xlu0 %v1027, 8
    %v1029 = vpop.permute.xlu0 %1028
    %v1032 = vunpack.c.l.b16 %v947
    %v1033 = vunpack.c.l.b16 %v948
    %v1034 = vpack.c.b16 %v1033, %v1032
    %1035 = vrot.lane.b32.xlu0 %v1034, 16
    %v1036 = vpop.permute.xlu0 %1035
    %v1039 = vunpack.c.l.b16 %v1016
    %v1040 = vunpack.c.l.b16 %v1017
    %v1041 = vpack.c.b16 %v1040, %v1039
    %1042 = vrot.lane.b32.xlu0 %v1041, 24
    %v1043 = vpop.permute.xlu0 %1042
    %v1046 = vsel %vm117, %v1022, %v1029
    %v1048 = vsel %vm48, %v1046, %v1036
    %v1050 = vsel %vm421, %v1048, %v1043
    %1051 = vrot.lane.b32.xlu0 %v721, 32
    %v1052 = vpop.permute.xlu0 %1051
    %1053 = vrot.lane.b32.xlu0 %v722, 32
    %v1054 = vpop.permute.xlu0 %1053
    %1057 = vrot.lane.b32.xlu0 %v711, 32
    %v1058 = vpop.permute.xlu0 %1057
    %v1060 = vsel %vm87, %v1050, 0
    %1062 = vmatpush.bf16.msra.mxu0 0
    %1063 = vmatpush.bf16.msra.mxu0 0
    %1064 = vmatpush.bf16.msra.mxu0 0
    %1065 = vmatpush.bf16.msra.mxu0 0
    %1066 = vmatpush.bf16.msra.mxu0 0
    %1067 = vmatpush.bf16.msra.mxu0 0
    %1068 = vmatpush.bf16.msra.mxu0 %v1054
    %1069 = vmatpush.bf16.msra.mxu0 %v1052
    %1070 = vmatmul.bf16.gmra.mxu0 %v1060
    %v1071 = vpop.f32.mrf.mxu0
    %v1072 = vadd.f32 %v1058, %v1071
    %v1073 = vpop.f32.mrf.mxu0
    %v1074 = vadd.f32 %v1058, %v1073
    %1075 = vdwg.mxu0
    %v1076 = vadd.f32 %v700, %v1072
    %v1077 = vadd.f32 %v701, %v1074
    %v1078 = vld [vmem:[%s708 + $0x1] sm:$0x1]
    %v1079 = vsel %vm87, %v1076, 0.0
    %1080 = vadd.xlane.f32.xlu0 %v1079
    %v1081 = vpop.xlane.xlu0 %1080
    %v1082 = vsel %vm87, %v1077, 0.0
    %1083 = vadd.xlane.f32.xlu0 %v1082
    %v1084 = vpop.xlane.xlu0 %1083
    %v1085 = vmul.f32 %v1081, %v464
    %v1086 = vmul.f32 %v1084, %v464
    %v1087 = vsub.f32 %v1076, %v1085
    %v1088 = vsub.f32 %v1077, %v1086
    %v1089 = vmul.f32 %v1087, %v1087
    %v1090 = vmul.f32 %v1088, %v1088
    %v1091 = vsel %vm87, %v1089, 0.0
    %1092 = vadd.xlane.f32.xlu0 %v1091
    %v1093 = vpop.xlane.xlu0 %1092
    %v1094 = vsel %vm87, %v1090, 0.0
    %1095 = vadd.xlane.f32.xlu0 %v1094
    %v1096 = vpop.xlane.xlu0 %1095
    %v1097 = vmul.f32 %v1093, %v464
    %v1098 = vmul.f32 %v1096, %v464
    %v1099 = vadd.f32 %v1097, 1e-05
    %v1100 = vadd.f32 %v1098, 1e-05
    %v1101 = vrsqrt.pop %v1099
    %v1102 = vmul.f32 %v1101, %v1099
    %v1103 = vmul.f32 %v1102, %v1101
    %v1104 = vmul.f32 0.5, %v1103
    %v1105 = vsub.f32 1.5, %v1104
    %v1106 = vmul.f32 %v1101, %v1105
    %vm1107 = vweird.f32 %v1099
    %vm1108 = vweird.f32 %v1101
    %vm1109 = vmor %vm1107, %vm1108
    %v1110 = vsel %vm1109, %v1101, %v1106
    %v1111 = vrsqrt.pop %v1100
    %v1112 = vmul.f32 %v1111, %v1100
    %v1113 = vmul.f32 %v1112, %v1111
    %v1114 = vmul.f32 0.5, %v1113
    %v1115 = vsub.f32 1.5, %v1114
    %v1116 = vmul.f32 %v1111, %v1115
    %vm1117 = vweird.f32 %v1100
    %vm1118 = vweird.f32 %v1111
    %vm1119 = vmor %vm1117, %vm1118
    %v1120 = vsel %vm1119, %v1111, %v1116
    %v1121 = vmul.f32 %v1087, %v1110
    %v1122 = vmul.f32 %v1088, %v1120
    %v1124 = vperm.slane %v1078, 0
    %v1126 = vmul.f32 %v1121, %v1124
    %v1127 = vmul.f32 %v1122, %v1124
    %1128 = vrot.lane.b32.xlu0 %v1124, 96
    %v1129 = vpop.permute.xlu0 %1128
    %v1131 = vadd.f32 %v1126, %v1129
    %v1132 = vadd.f32 %v1127, %v1129
    %v1133 = vpack.c.bf16 %v1132, %v1131
    %v1134 = vld [vmem:[%s703 + $0x4] sm:$0xf]
    %v1135 = vld [vmem:[%s703 + $0xc] sm:$0xf]
    %v1136 = vld [vmem:[%s703 + $0x14] sm:$0xf]
    %v1137 = vld [vmem:[%s703 + $0x1c] sm:$0xf]
    %v1138 = vld [vmem:[%s708 + $0x1] sm:$0x3]
    %v1140 = vperm.slane %v1138, 0
    %v1141 = vperm.slane %v1138, 1
    %v1146 = vunpack.c.l.b16 %v1134
    %v1147 = vunpack.c.l.b16 %v1135
    %v1148 = vunpack.c.l.b16 %v1136
    %v1149 = vunpack.c.l.b16 %v1137
    %v1150 = vpack.c.b16 %v1147, %v1146
    %v1151 = vpack.c.b16 %v1149, %v1148
    %1154 = vrot.lane.b32.xlu0 %v1140, 64
    %v1155 = vpop.permute.xlu0 %1154
    %1156 = vrot.lane.b32.xlu0 %v1141, 64
    %v1157 = vpop.permute.xlu0 %1156
    %v1158 = vsel %vm538, %v1155, %v1157
    %v1161 = vsel %vm87, %v1133, 0
    %1163 = vmatpush.bf16.msra.mxu0 0
    %1164 = vmatpush.bf16.msra.mxu0 0
    %1165 = vmatpush.bf16.msra.mxu0 0
    %1166 = vmatpush.bf16.msra.mxu0 0
    %1167 = vmatpush.bf16.msra.mxu0 0
    %1168 = vmatpush.bf16.msra.mxu0 0
    %1169 = vmatpush.bf16.msra.mxu0 %v1151
    %1170 = vmatpush.bf16.msra.mxu0 %v1150
    %1171 = vmatmul.bf16.gmra.mxu0 %v1161
    %v1172 = vpop.f32.mrf.mxu0
    %v1173 = vadd.f32 %v1158, %v1172
    %v1174 = vpop.f32.mrf.mxu0
    %v1175 = vadd.f32 %v1158, %v1174
    %1176 = vdwg.mxu0
    %v1177 = vmax.f32 %v1173, 0.0
    %v1178 = vmax.f32 %v1175, 0.0
    %v1179 = vpack.c.bf16 %v1178, %v1177
    %s1180 = scalar_lea.vmem %s4, 64
    %v1181 = vld [vmem:[%s1180] sm:$0xf]
    %v1182 = vld [vmem:[%s1180 + $0x4] sm:$0xf]
    %v1183 = vld [vmem:[%s1180 + $0x8] sm:$0xf]
    %v1184 = vld [vmem:[%s1180 + $0xc] sm:$0xf]
    %v1185 = vld [vmem:[%s1180 + $0x10] sm:$0xf]
    %v1186 = vld [vmem:[%s1180 + $0x14] sm:$0xf]
    %v1187 = vld [vmem:[%s1180 + $0x18] sm:$0xf]
    %v1188 = vld [vmem:[%s1180 + $0x1c] sm:$0xf]
    %v1189 = vld [vmem:[%s1180 + $0x20] sm:$0xf]
    %v1190 = vld [vmem:[%s1180 + $0x24] sm:$0xf]
    %v1191 = vld [vmem:[%s1180 + $0x28] sm:$0xf]
    %v1192 = vld [vmem:[%s1180 + $0x2c] sm:$0xf]
    %v1193 = vld [vmem:[%s1180 + $0x30] sm:$0xf]
    %v1194 = vld [vmem:[%s1180 + $0x34] sm:$0xf]
    %v1195 = vld [vmem:[%s1180 + $0x38] sm:$0xf]
    %v1196 = vld [vmem:[%s1180 + $0x3c] sm:$0xf]
    %v1197 = vld [vmem:[%s708 + $0x2] sm:$0x1]
    %v1199 = vperm.slane %v1197, 0
    %v1216 = vunpack.c.l.b16 %v1181
    %v1217 = vunpack.c.l.b16 %v1182
    %v1218 = vunpack.c.l.b16 %v1183
    %v1219 = vunpack.c.l.b16 %v1184
    %v1220 = vunpack.c.l.b16 %v1185
    %v1221 = vunpack.c.l.b16 %v1186
    %v1222 = vunpack.c.l.b16 %v1187
    %v1223 = vunpack.c.l.b16 %v1188
    %v1224 = vunpack.c.l.b16 %v1189
    %v1225 = vunpack.c.l.b16 %v1190
    %v1226 = vunpack.c.l.b16 %v1191
    %v1227 = vunpack.c.l.b16 %v1192
    %v1228 = vunpack.c.l.b16 %v1193
    %v1229 = vunpack.c.l.b16 %v1194
    %v1230 = vunpack.c.l.b16 %v1195
    %v1231 = vunpack.c.l.b16 %v1196
    %v1232 = vpack.c.b16 %v1217, %v1216
    %v1233 = vpack.c.b16 %v1219, %v1218
    %v1234 = vpack.c.b16 %v1221, %v1220
    %v1235 = vpack.c.b16 %v1223, %v1222
    %v1236 = vpack.c.b16 %v1225, %v1224
    %v1237 = vpack.c.b16 %v1227, %v1226
    %v1238 = vpack.c.b16 %v1229, %v1228
    %v1239 = vpack.c.b16 %v1231, %v1230
    %1248 = vrot.lane.b32.xlu0 %v1199, 64
    %v1249 = vpop.permute.xlu0 %1248
    %1251 = vmatpush.bf16.msra.mxu0 %v1239
    %1252 = vmatpush.bf16.msra.mxu0 %v1238
    %1253 = vmatpush.bf16.msra.mxu0 %v1237
    %1254 = vmatpush.bf16.msra.mxu0 %v1236
    %1255 = vmatpush.bf16.msra.mxu0 %v1235
    %1256 = vmatpush.bf16.msra.mxu0 %v1234
    %1257 = vmatpush.bf16.msra.mxu0 %v1233
    %1258 = vmatpush.bf16.msra.mxu0 %v1232
    %1259 = vmatmul.bf16.gmra.mxu0 %v1179
    %v1260 = vpop.f32.mrf.mxu0
    %v1261 = vadd.f32 %v1249, %v1260
    %v1262 = vpop.f32.mrf.mxu0
    %v1263 = vadd.f32 %v1249, %v1262
    %1264 = vdwg.mxu0
    %v1265 = vadd.f32 %v1131, %v1261
    %v1266 = vadd.f32 %v1132, %v1263
    %v1267 = vld [vmem:[%s708 + $0x3] sm:$0x1]
    %v1268 = vsel %vm87, %v1265, 0.0
    %1269 = vadd.xlane.f32.xlu0 %v1268
    %v1270 = vpop.xlane.xlu0 %1269
    %v1271 = vsel %vm87, %v1266, 0.0
    %1272 = vadd.xlane.f32.xlu0 %v1271
    %v1273 = vpop.xlane.xlu0 %1272
    %v1274 = vmul.f32 %v1270, %v464
    %v1275 = vmul.f32 %v1273, %v464
    %v1276 = vsub.f32 %v1265, %v1274
    %v1277 = vsub.f32 %v1266, %v1275
    %v1278 = vmul.f32 %v1276, %v1276
    %v1279 = vmul.f32 %v1277, %v1277
    %v1280 = vsel %vm87, %v1278, 0.0
    %1281 = vadd.xlane.f32.xlu0 %v1280
    %v1282 = vpop.xlane.xlu0 %1281
    %v1283 = vsel %vm87, %v1279, 0.0
    %1284 = vadd.xlane.f32.xlu0 %v1283
    %v1285 = vpop.xlane.xlu0 %1284
    %v1286 = vmul.f32 %v1282, %v464
    %v1287 = vmul.f32 %v1285, %v464
    %v1288 = vadd.f32 %v1286, 1e-05
    %v1289 = vadd.f32 %v1287, 1e-05
    %v1290 = vrsqrt.pop %v1288
    %v1291 = vmul.f32 %v1290, %v1288
    %v1292 = vmul.f32 %v1291, %v1290
    %v1293 = vmul.f32 0.5, %v1292
    %v1294 = vsub.f32 1.5, %v1293
    %v1295 = vmul.f32 %v1290, %v1294
    %vm1296 = vweird.f32 %v1288
    %vm1297 = vweird.f32 %v1290
    %vm1298 = vmor %vm1296, %vm1297
    %v1299 = vsel %vm1298, %v1290, %v1295
    %v1300 = vrsqrt.pop %v1289
    %v1301 = vmul.f32 %v1300, %v1289
    %v1302 = vmul.f32 %v1301, %v1300
    %v1303 = vmul.f32 0.5, %v1302
    %v1304 = vsub.f32 1.5, %v1303
    %v1305 = vmul.f32 %v1300, %v1304
    %vm1306 = vweird.f32 %v1289
    %vm1307 = vweird.f32 %v1300
    %vm1308 = vmor %vm1306, %vm1307
    %v1309 = vsel %vm1308, %v1300, %v1305
    %v1310 = vmul.f32 %v1276, %v1299
    %v1311 = vmul.f32 %v1277, %v1309
    %1312 = vrot.lane.b32.xlu0 %v1199, 32
    %v1313 = vpop.permute.xlu0 %1312
    %v1315 = vmul.f32 %v1310, %v1313
    %v1316 = vmul.f32 %v1311, %v1313
    %v1318 = vperm.slane %v1267, 0
    %v1320 = vadd.f32 %v1315, %v1318
    %v1321 = vadd.f32 %v1316, %v1318
    %v1322 = vpack.c.bf16 %v1321, %v1320
    %v1323 = vld [vmem:[%s6] sm:$0xf]
    %v1324 = vld [vmem:[%s6 + $0x4] sm:$0xf]
    %v1325 = vld [vmem:[%s6 + $0x8] sm:$0xf]
    %v1326 = vld [vmem:[%s6 + $0xc] sm:$0xf]
    %v1331 = vunpack.c.l.b16 %v1323
    %v1332 = vunpack.c.l.b16 %v1324
    %v1333 = vunpack.c.l.b16 %v1325
    %v1334 = vunpack.c.l.b16 %v1326
    %v1335 = vpack.c.b16 %v1332, %v1331
    %v1336 = vpack.c.b16 %v1334, %v1333
    %1339 = vrot.lane.b32.xlu0 %v698, 96
    %v1340 = vpop.permute.xlu0 %1339
    %v1343 = vsel %vm87, %v1322, 0
    %1345 = vmatpush.bf16.msra.mxu0 0
    %1346 = vmatpush.bf16.msra.mxu0 0
    %1347 = vmatpush.bf16.msra.mxu0 0
    %1348 = vmatpush.bf16.msra.mxu0 0
    %1349 = vmatpush.bf16.msra.mxu0 0
    %1350 = vmatpush.bf16.msra.mxu0 0
    %1351 = vmatpush.bf16.msra.mxu0 %v1336
    %1352 = vmatpush.bf16.msra.mxu0 %v1335
    %1353 = vmatmul.bf16.gmra.mxu0 %v1343
    %v1354 = vpop.f32.mrf.mxu0
    %v1355 = vadd.f32 %v1340, %v1354
    %v1356 = vpop.f32.mrf.mxu0
    %v1357 = vadd.f32 %v1340, %v1356
    %1358 = vdwg.mxu0
    %v1359 = vtanh.pop %v1355
    %v1360 = vtanh.pop %v1357
    %v1361 = vpack.c.bf16 %v1360, %v1359
    %v1362 = vld [vmem:[%s7] sm:$0xf]
    %v1363 = vld [vmem:[%s7 + $0x4] sm:$0xf]
    %v1366 = vunpack.c.l.b16 %v1362
    %v1367 = vunpack.c.l.b16 %v1363
    %v1368 = vpack.c.b16 %v1367, %v1366
    %1370 = vrot.lane.b32.xlu0 %v698, 80
    %v1371 = vpop.permute.xlu0 %1370
    %v1374 = vsel %vm48, %v1361, 0
    %1376 = vmatpush.bf16.msra.mxu0 0
    %1377 = vmatpush.bf16.msra.mxu0 0
    %1378 = vmatpush.bf16.msra.mxu0 0
    %1379 = vmatpush.bf16.msra.mxu0 0
    %1380 = vmatpush.bf16.msra.mxu0 0
    %1381 = vmatpush.bf16.msra.mxu0 0
    %1382 = vmatpush.bf16.msra.mxu0 0
    %1383 = vmatpush.bf16.msra.mxu0 %v1368
    %1384 = vmatmul.bf16.gmra.mxu0 %v1374
    %v1385 = vpop.f32.mrf.mxu0
    %v1386 = vadd.f32 %v1371, %v1385
    %v1387 = vpop.f32.mrf.mxu0
    %v1388 = vadd.f32 %v1371, %v1387
    %1389 = vdwg.mxu0
    %1391 = vset.pattern.permute.xlu0 0
    %1392 = vperm.xlu0 %1391, %v1386
    %v1393 = vpop.permute.xlu0 %1392
    %1396 = vset.pattern.permute.xlu0 0
    %1397 = vperm.xlu0 %1396, %v1388
    %v1398 = vpop.permute.xlu0 %1397
    %1400 = vst [vmem:[#allocation2] sm:$0xff] %v1393
    %1401 = vst [vmem:[#allocation2 + $0x8] sm:$0xff] %v1398
    // Predicated region
    $region34: #{tpu_custom_call.1} parent=1 // pred_check
      _
    $region35: #{tpu_custom_call.1} parent=1 // pred_check_branch
      %1403 = sbr.rel (0) target = $region37
    $region36: #{tpu_custom_call.1} parent=1 // pred_region
      %1405 = vsyncadd [#allocation3], 0
      %s1406 = sshll.u32 [#allocation2], 4
      %s1407 = int_to_ptr.vmem [resolvable:$true] %s1406
      %s1408 = sshll.u32 %s8, 4
      %s1409 = int_to_ptr.hbm [resolvable:$true] %s1408
      %1414 = dma.vmem_to_hbm [thread:$0]  %s1407, 256, %s1409, [#allocation3], 128, 128, 8
    $region37: #{tpu_custom_call.1} parent=1 // pred_fallthru
      _
    // Predicated region
    $region38: #{tpu_custom_call.1} parent=1 // pred_check
      _
    $region39: #{tpu_custom_call.1} parent=1 // pred_check_branch
      %1416 = sbr.rel (0) target = $region41
    $region40: #{tpu_custom_call.1} parent=1 // pred_region
      %1418 = dma.done [#allocation3], 256
    $region41: #{tpu_custom_call.1} parent=1 // pred_fallthru
      _
    %1419 = vsyncpa [#allocation3], 1

</llo_original>
